<compile_context>
chip_gen: v5e
topology: v5e:2x2
jax: 0.10.0
libtpu: 0.0.40
codegen_flags: <defaults>
</compile_context>

<pallas_src>
import jax
import jax.numpy as jnp
from jax.experimental import pallas as pl
from jax.experimental.pallas import tpu as pltpu


# Padded feature dims (lane-dense, multiples of 128).
F1 = 1024        # Linear(3, 1000)   -> pad 1000 -> 1024
F2 = 512         # Linear(1000, 500) -> pad 500  -> 512
F3 = 128         # Linear(500, 128)
F4 = 128         # Linear(128, 2)    -> pad 2    -> 128
N_CLASSES = 2


def _round_up(n, m):
    return ((n + m - 1) // m) * m


def fused_forward_kernel(x_ref,                     # (BT, HW_CHUNK) f32
                         weff_ref, beff_ref,        # (1, F1) f32 each
                         w1_ref, b1_ref,            # (F1, F2) bf16, (1, F2) f32
                         w2_ref, b2_ref,            # (F2, F3) bf16, (1, F3) f32
                         w3_ref, b3_ref,            # (F3, F4) bf16, (1, F4) f32
                         o_ref,                     # (BT, F4) f32
                         msum_ref):                 # (BT, 1) f32 scratch
    j = pl.program_id(1)

    @pl.when(j == 0)
    def _():
        msum_ref[...] = jnp.zeros_like(msum_ref)

    # ---- streamed GAP: accumulate the per-row spatial sum for this HW chunk ----
    # (zero padding in both the image lanes and the conv's spatial padding
    #  contributes nothing to the sum; the conv bias is folded into beff).
    msum_ref[...] += jnp.sum(x_ref[...], axis=1, keepdims=True)

    @pl.when(j == pl.num_programs(1) - 1)
    def _():
        m = msum_ref[...]                                        # (BT, 1) f32

        # ---- conv(1x1,pad=1) + GAP + Linear(3,1000) folded to one affine + ReLU ----
        f = jnp.maximum(beff_ref[...] + m * weff_ref[...], 0.0)  # (BT, F1) f32

        # ---- head: Linear(1000,500) -> Dropout (identity, eval) -> ReLU ----
        h1 = jnp.dot(f.astype(jnp.bfloat16), w1_ref[...],
                     preferred_element_type=jnp.float32) + b1_ref[...]
        h1 = jnp.maximum(h1, 0.0)                                # (BT, F2) f32

        # ---- Linear(500,128) -> ReLU ----
        h2 = jnp.dot(h1.astype(jnp.bfloat16), w2_ref[...],
                     preferred_element_type=jnp.float32) + b2_ref[...]
        h2 = jnp.maximum(h2, 0.0)                                # (BT, F3) f32

        # ---- Linear(128,2), output padded to 128 lanes (sliced in the wrapper) ----
        o_ref[...] = jnp.dot(h2.astype(jnp.bfloat16), w3_ref[...],
                             preferred_element_type=jnp.float32) + b3_ref[...]


def bizim_model_forward(x, weights, *, batch_tile=256, hw_chunk=4096):
    # x: [B, 1, H, W] float32 (NCHW, matching the PyTorch module).
    B, C, H, W = x.shape
    assert C == 1
    HW = H * W
    # GAP runs over the zero-padded (H+2)x(W+2) conv output, as in the stand-in.
    inv_area = 1.0 / float((H + 2) * (W + 2))

    # ---- fold conv(1x1) + GAP + Linear(3,1000) into a single affine (tiny XLA op) ----
    wp = weights["wp"]                                           # (3, F1) f32
    weff = (inv_area * (weights["conv_w"][None, :] @ wp)).astype(jnp.float32)  # (1, F1)
    beff = (weights["bp"] + weights["conv_b"][None, :] @ wp).astype(jnp.float32)

    # ---- lane-dense x: flatten spatial dims, pad lanes to a multiple of HW_CHUNK ----
    x2d = x.reshape(B, HW).astype(jnp.float32)
    HWp0 = _round_up(HW, 128)
    hw_chunk = max(128, (min(hw_chunk, HWp0) // 128) * 128)
    n_hw = pl.cdiv(HWp0, hw_chunk)
    HWp = n_hw * hw_chunk

    # ---- balanced batch tiling: avoid ~2x padded work for awkward batch sizes ----
    n_bt = pl.cdiv(B, batch_tile)
    BT = _round_up(pl.cdiv(B, n_bt), 8)
    Bp = n_bt * BT

    if (Bp, HWp) != (B, HW):
        x2d = jnp.pad(x2d, ((0, Bp - B), (0, HWp - HW)))         # zeros don't change sums

    grid = (n_bt, n_hw)

    def resident(shape):
        # Constant block index across the whole grid -> single-buffer (saves VMEM).
        return pl.BlockSpec(shape, lambda i, j: (0, 0), pipeline_mode=pl.Buffered(1))

    # Explicit VMEM budget derived from the actual tile footprint (v7x-safe).
    vmem_est = (2 * BT * hw_chunk * 4                            # x tile, double-buffered
                + 2 * BT * F4 * 4                                # out tile, double-buffered
                + (F1 * F2 + F2 * F3 + F3 * F4) * 2              # bf16 weights, single-buffered
                + (2 * F1 + F2 + F3 + F4) * 4                    # weff/beff + biases (f32)
                + BT * 128 * 4                                   # msum scratch (lane-padded)
                + 3 * BT * F1 * 4)                               # f/h temporaries headroom
    vmem_limit = int(min(vmem_est + (16 << 20), 48 << 20))

    out = pl.pallas_call(
        fused_forward_kernel,
        out_shape=jax.ShapeDtypeStruct((Bp, F4), jnp.float32),
        grid=grid,
        in_specs=[
            pl.BlockSpec((BT, hw_chunk), lambda i, j: (i, j)),   # x: streamed over HW chunks
            resident((1, F1)), resident((1, F1)),                # weff, beff
            resident((F1, F2)), resident((1, F2)),               # w1, b1
            resident((F2, F3)), resident((1, F3)),               # w2, b2
            resident((F3, F4)), resident((1, F4)),               # w3, b3
        ],
        out_specs=pl.BlockSpec((BT, F4), lambda i, j: (i, 0)),   # resident across HW axis
        scratch_shapes=[pltpu.VMEM((BT, 1), jnp.float32)],       # per-row GAP accumulator
        compiler_params=pltpu.CompilerParams(
            dimension_semantics=("parallel", "arbitrary"),
            vmem_limit_bytes=vmem_limit),
    )(x2d, weff, beff,
      weights["w1"], weights["b1"],
      weights["w2"], weights["b2"],
      weights["w3"], weights["b3"])

    return out[:B, :N_CLASSES]


def init_weights(key):
    # Deterministic synthetic weights.  Linear weights are stored pre-transposed
    # as (in_features, out_features) so the kernel computes x @ W + b (matching
    # PyTorch's x @ W_torch.T + b), zero-padded to lane-dense padded dims so the
    # padded math is exactly equivalent to the unpadded module.
    ks = jax.random.split(key, 6)

    def lin(k, fan_in, fan_out, pad_in, pad_out, w_dtype):
        scale = 1.0 / jnp.sqrt(jnp.float32(fan_in))
        kw, kb = jax.random.split(k)
        w = jax.random.uniform(kw, (fan_in, fan_out), jnp.float32, -scale, scale)
        b = jax.random.uniform(kb, (1, fan_out), jnp.float32, -scale, scale)
        w = jnp.pad(w, ((0, pad_in - fan_in), (0, pad_out - fan_out))).astype(w_dtype)
        b = jnp.pad(b, ((0, 0), (0, pad_out - fan_out)))
        return w, b

    conv_w = jax.random.uniform(ks[0], (3,), jnp.float32, -1.0, 1.0)  # Conv2d(1,3,1x1)
    conv_b = jax.random.uniform(ks[1], (3,), jnp.float32, -1.0, 1.0)

    wp, bp = lin(ks[2], 3, 1000, 3, F1, jnp.float32)        # stand-in backbone Linear(3,1000)
    w1, b1 = lin(ks[3], 1000, 500, F1, F2, jnp.bfloat16)    # Linear(1000, 500)
    w2, b2 = lin(ks[4], 500, 128, F2, F3, jnp.bfloat16)     # Linear(500, 128)
    w3, b3 = lin(ks[5], 128, N_CLASSES, F3, F4, jnp.bfloat16)  # Linear(128, 2)

    return {
        "conv_w": conv_w, "conv_b": conv_b,
        "wp": wp, "bp": bp,
        "w1": w1, "b1": b1,
        "w2": w2, "b2": b2,
        "w3": w3, "b3": b3,
    }


if __name__ == "__main__":
    key = jax.random.PRNGKey(0)
    k_x, k_w = jax.random.split(key)

    B, H, W = 2, 16, 16
    x = jax.random.normal(k_x, (B, 1, H, W), jnp.float32)   # NCHW, 1 input channel
    weights = init_weights(k_w)

    out = bizim_model_forward(x, weights)
    out = jax.block_until_ready(out)

    assert out.shape == (B, 2) and out.dtype == jnp.float32
    assert bool(jnp.all(jnp.isfinite(out)))
    print("KERNEL_OK")
</pallas_src>

<mosaic_0001>
module attributes {stable_mosaic.version = 11 : i64} {
  func.func @fused_forward_kernel(%arg0: i32, %arg1: i32, %arg2: memref<8x256xf32, #tpu.memory_space<vmem>>, %arg3: memref<1x1024xf32, #tpu.memory_space<vmem>>, %arg4: memref<1x1024xf32, #tpu.memory_space<vmem>>, %arg5: memref<1024x512xbf16, #tpu.memory_space<vmem>>, %arg6: memref<1x512xf32, #tpu.memory_space<vmem>>, %arg7: memref<512x128xbf16, #tpu.memory_space<vmem>>, %arg8: memref<1x128xf32, #tpu.memory_space<vmem>>, %arg9: memref<128x128xbf16, #tpu.memory_space<vmem>>, %arg10: memref<1x128xf32, #tpu.memory_space<vmem>>, %arg11: memref<8x128xf32, #tpu.memory_space<vmem>>, %arg12: memref<8x1xf32, #tpu.memory_space<vmem>>) attributes {dimension_semantics = [#tpu.dimension_semantics<parallel>, #tpu.dimension_semantics<arbitrary>], iteration_bounds = array<i64: 1, 1>, scalar_prefetch = 0 : i64, scratch_operands = 1 : i64, tpu.core_type = #tpu.core_type<tc>, window_params = [{transform_indices = @transform_0, window_bounds = array<i64: 8, 256>}, {pipeline_mode = #tpu.pipeline_mode<synchronous>, transform_indices = @transform_1, window_bounds = array<i64: 1, 1024>}, {pipeline_mode = #tpu.pipeline_mode<synchronous>, transform_indices = @transform_2, window_bounds = array<i64: 1, 1024>}, {pipeline_mode = #tpu.pipeline_mode<synchronous>, transform_indices = @transform_3, window_bounds = array<i64: 1024, 512>}, {pipeline_mode = #tpu.pipeline_mode<synchronous>, transform_indices = @transform_4, window_bounds = array<i64: 1, 512>}, {pipeline_mode = #tpu.pipeline_mode<synchronous>, transform_indices = @transform_5, window_bounds = array<i64: 512, 128>}, {pipeline_mode = #tpu.pipeline_mode<synchronous>, transform_indices = @transform_6, window_bounds = array<i64: 1, 128>}, {pipeline_mode = #tpu.pipeline_mode<synchronous>, transform_indices = @transform_7, window_bounds = array<i64: 128, 128>}, {pipeline_mode = #tpu.pipeline_mode<synchronous>, transform_indices = @transform_8, window_bounds = array<i64: 1, 128>}, {transform_indices = @transform_9, window_bounds = array<i64: 8, 128>}]} {
    %c0_i32 = arith.constant 0 : i32
    %0 = arith.cmpi eq, %arg1, %c0_i32 : i32
    %1 = arith.extui %0 : i1 to i32
    %c0_i32_0 = arith.constant 0 : i32
    %2 = arith.cmpi ne, %1, %c0_i32_0 : i32
    scf.if %2 {
      %cst_8 = arith.constant 0.000000e+00 : f32
      %12 = vector.broadcast %cst_8 : f32 to vector<8x1xf32>
      %c0_9 = arith.constant 0 : index
      %c0_10 = arith.constant 0 : index
      %13 = vector.load %arg12[%c0_9, %c0_10] : memref<8x1xf32, #tpu.memory_space<vmem>>, vector<8x1xf32>
      tpu.vector_store %arg12[%c0_9, %c0_10], %12 {strides = array<i32>} : memref<8x1xf32, #tpu.memory_space<vmem>>, vector<8x1xf32>,
    } else {
    }
    %c0 = arith.constant 0 : index
    %c0_1 = arith.constant 0 : index
    %3 = vector.load %arg12[%c0, %c0_1] : memref<8x1xf32, #tpu.memory_space<vmem>>, vector<8x1xf32>
    %c0_2 = arith.constant 0 : index
    %c0_3 = arith.constant 0 : index
    %4 = vector.load %arg2[%c0_2, %c0_3] : memref<8x256xf32, #tpu.memory_space<vmem>>, vector<8x256xf32>
    %cst = arith.constant dense<0.000000e+00> : vector<8xf32>
    %5 = vector.multi_reduction <add>, %4, %cst [1] : vector<8x256xf32> to vector<8xf32>
    %6 = vector.shape_cast %5 : vector<8xf32> to vector<8x1xf32>
    %7 = arith.addf %3, %6 : vector<8x1xf32>
    %c0_4 = arith.constant 0 : index
    %c0_5 = arith.constant 0 : index
    %8 = vector.load %arg12[%c0_4, %c0_5] : memref<8x1xf32, #tpu.memory_space<vmem>>, vector<8x1xf32>
    tpu.vector_store %arg12[%c0_4, %c0_5], %7 {strides = array<i32>} : memref<8x1xf32, #tpu.memory_space<vmem>>, vector<8x1xf32>,
    %c0_i32_6 = arith.constant 0 : i32
    %9 = arith.cmpi eq, %arg1, %c0_i32_6 : i32
    %10 = arith.extui %9 : i1 to i32
    %c0_i32_7 = arith.constant 0 : i32
    %11 = arith.cmpi ne, %10, %c0_i32_7 : i32
    scf.if %11 {
      %c0_8 = arith.constant 0 : index
      %c0_9 = arith.constant 0 : index
      %12 = vector.load %arg12[%c0_8, %c0_9] : memref<8x1xf32, #tpu.memory_space<vmem>>, vector<8x1xf32>
      %c0_10 = arith.constant 0 : index
      %c0_11 = arith.constant 0 : index
      %13 = vector.load %arg4[%c0_10, %c0_11] : memref<1x1024xf32, #tpu.memory_space<vmem>>, vector<1x1024xf32>
      %c0_12 = arith.constant 0 : index
      %c0_13 = arith.constant 0 : index
      %14 = vector.load %arg3[%c0_12, %c0_13] : memref<1x1024xf32, #tpu.memory_space<vmem>>, vector<1x1024xf32>
      %15 = vector.broadcast %12 : vector<8x1xf32> to vector<8x1024xf32>
      %16 = vector.broadcast %14 : vector<1x1024xf32> to vector<8x1024xf32>
      %17 = arith.mulf %15, %16 : vector<8x1024xf32>
      %18 = vector.broadcast %13 : vector<1x1024xf32> to vector<8x1024xf32>
      %19 = arith.addf %18, %17 : vector<8x1024xf32>
      %cst_14 = arith.constant 0.000000e+00 : f32
      %20 = vector.broadcast %cst_14 : f32 to vector<8x1024xf32>
      %21 = arith.maximumf %19, %20 : vector<8x1024xf32>
      %22 = arith.truncf %21 : vector<8x1024xf32> to vector<8x1024xbf16>
      %c0_15 = arith.constant 0 : index
      %c0_16 = arith.constant 0 : index
      %23 = vector.load %arg5[%c0_15, %c0_16] : memref<1024x512xbf16, #tpu.memory_space<vmem>>, vector<1024x512xbf16>
      %cst_17 = arith.constant dense<0.000000e+00> : vector<8x512xf32>
      %24 = tpu.matmul %22, %23, %cst_17 {dimension_numbers = #tpu.dot_dimension_numbers<[1], [0], [0], [1], [0, 0, 1, 1], [], []>} : vector<8x1024xbf16>, vector<1024x512xbf16>, vector<8x512xf32> -> vector<8x512xf32>
      %c0_18 = arith.constant 0 : index
      %c0_19 = arith.constant 0 : index
      %25 = vector.load %arg6[%c0_18, %c0_19] : memref<1x512xf32, #tpu.memory_space<vmem>>, vector<1x512xf32>
      %26 = vector.broadcast %25 : vector<1x512xf32> to vector<8x512xf32>
      %27 = arith.addf %24, %26 : vector<8x512xf32>
      %cst_20 = arith.constant 0.000000e+00 : f32
      %28 = vector.broadcast %cst_20 : f32 to vector<8x512xf32>
      %29 = arith.maximumf %27, %28 : vector<8x512xf32>
      %30 = arith.truncf %29 : vector<8x512xf32> to vector<8x512xbf16>
      %c0_21 = arith.constant 0 : index
      %c0_22 = arith.constant 0 : index
      %31 = vector.load %arg7[%c0_21, %c0_22] : memref<512x128xbf16, #tpu.memory_space<vmem>>, vector<512x128xbf16>
      %cst_23 = arith.constant dense<0.000000e+00> : vector<8x128xf32>
      %32 = tpu.matmul %30, %31, %cst_23 {dimension_numbers = #tpu.dot_dimension_numbers<[1], [0], [0], [1], [0, 0, 1, 1], [], []>} : vector<8x512xbf16>, vector<512x128xbf16>, vector<8x128xf32> -> vector<8x128xf32>
      %c0_24 = arith.constant 0 : index
      %c0_25 = arith.constant 0 : index
      %33 = vector.load %arg8[%c0_24, %c0_25] : memref<1x128xf32, #tpu.memory_space<vmem>>, vector<1x128xf32>
      %34 = vector.broadcast %33 : vector<1x128xf32> to vector<8x128xf32>
      %35 = arith.addf %32, %34 : vector<8x128xf32>
      %cst_26 = arith.constant 0.000000e+00 : f32
      %36 = vector.broadcast %cst_26 : f32 to vector<8x128xf32>
      %37 = arith.maximumf %35, %36 : vector<8x128xf32>
      %38 = arith.truncf %37 : vector<8x128xf32> to vector<8x128xbf16>
      %c0_27 = arith.constant 0 : index
      %c0_28 = arith.constant 0 : index
      %39 = vector.load %arg9[%c0_27, %c0_28] : memref<128x128xbf16, #tpu.memory_space<vmem>>, vector<128x128xbf16>
      %cst_29 = arith.constant dense<0.000000e+00> : vector<8x128xf32>
      %40 = tpu.matmul %38, %39, %cst_29 {dimension_numbers = #tpu.dot_dimension_numbers<[1], [0], [0], [1], [0, 0, 1, 1], [], []>} : vector<8x128xbf16>, vector<128x128xbf16>, vector<8x128xf32> -> vector<8x128xf32>
      %c0_30 = arith.constant 0 : index
      %c0_31 = arith.constant 0 : index
      %41 = vector.load %arg10[%c0_30, %c0_31] : memref<1x128xf32, #tpu.memory_space<vmem>>, vector<1x128xf32>
      %42 = vector.broadcast %41 : vector<1x128xf32> to vector<8x128xf32>
      %43 = arith.addf %40, %42 : vector<8x128xf32>
      %c0_32 = arith.constant 0 : index
      %c0_33 = arith.constant 0 : index
      %44 = vector.load %arg11[%c0_32, %c0_33] : memref<8x128xf32, #tpu.memory_space<vmem>>, vector<8x128xf32>
      tpu.vector_store %arg11[%c0_32, %c0_33], %43 {strides = array<i32>} : memref<8x128xf32, #tpu.memory_space<vmem>>, vector<8x128xf32>,
    } else {
    }
    return
  }
  func.func @transform_0(%arg0: i32, %arg1: i32) -> (i32, i32) {
    %c0_i32 = arith.constant 0 : i32
    return %arg0, %arg1 : i32, i32
  }
  func.func @transform_1(%arg0: i32, %arg1: i32) -> (i32, i32) {
    %c0_i32 = arith.constant 0 : i32
    %c0_i32_0 = arith.constant 0 : i32
    %c0_i32_1 = arith.constant 0 : i32
    return %c0_i32, %c0_i32_0 : i32, i32
  }
  func.func @transform_2(%arg0: i32, %arg1: i32) -> (i32, i32) {
    %c0_i32 = arith.constant 0 : i32
    %c0_i32_0 = arith.constant 0 : i32
    %c0_i32_1 = arith.constant 0 : i32
    return %c0_i32, %c0_i32_0 : i32, i32
  }
  func.func @transform_3(%arg0: i32, %arg1: i32) -> (i32, i32) {
    %c0_i32 = arith.constant 0 : i32
    %c0_i32_0 = arith.constant 0 : i32
    %c0_i32_1 = arith.constant 0 : i32
    return %c0_i32, %c0_i32_0 : i32, i32
  }
  func.func @transform_4(%arg0: i32, %arg1: i32) -> (i32, i32) {
    %c0_i32 = arith.constant 0 : i32
    %c0_i32_0 = arith.constant 0 : i32
    %c0_i32_1 = arith.constant 0 : i32
    return %c0_i32, %c0_i32_0 : i32, i32
  }
  func.func @transform_5(%arg0: i32, %arg1: i32) -> (i32, i32) {
    %c0_i32 = arith.constant 0 : i32
    %c0_i32_0 = arith.constant 0 : i32
    %c0_i32_1 = arith.constant 0 : i32
    return %c0_i32, %c0_i32_0 : i32, i32
  }
  func.func @transform_6(%arg0: i32, %arg1: i32) -> (i32, i32) {
    %c0_i32 = arith.constant 0 : i32
    %c0_i32_0 = arith.constant 0 : i32
    %c0_i32_1 = arith.constant 0 : i32
    return %c0_i32, %c0_i32_0 : i32, i32
  }
  func.func @transform_7(%arg0: i32, %arg1: i32) -> (i32, i32) {
    %c0_i32 = arith.constant 0 : i32
    %c0_i32_0 = arith.constant 0 : i32
    %c0_i32_1 = arith.constant 0 : i32
    return %c0_i32, %c0_i32_0 : i32, i32
  }
  func.func @transform_8(%arg0: i32, %arg1: i32) -> (i32, i32) {
    %c0_i32 = arith.constant 0 : i32
    %c0_i32_0 = arith.constant 0 : i32
    %c0_i32_1 = arith.constant 0 : i32
    return %c0_i32, %c0_i32_0 : i32, i32
  }
  func.func @transform_9(%arg0: i32, %arg1: i32) -> (i32, i32) {
    %c0_i32 = arith.constant 0 : i32
    %c0_i32_0 = arith.constant 0 : i32
    return %arg0, %c0_i32 : i32, i32
  }
}

</mosaic_0001>

<llo_original>
// kernel: tpu_custom_call.1
$region0: #{tpu_custom_call.1}
  #allocation0 [shape = 'u32[]', space=smem, size = 0x4, offset = 0x4, fixed_abs, tag = 'smem constant byte address 0x4 - core index']
  #allocation1 [shape = 'u32[72,128]{1,0:T(1,128)}', space=vmem, size = 0x9000, scoped, tag = 'internal scratch']
  #allocation2 [shape = 'f32[8,1]{1,0:T(8,128)}', space=vmem, size = 0x1000, scoped, tag = 'scratch operand']
  %s0 = inlined_call_operand.hbm [shape: f32[8,256], index: 0, kind: input, shape index: {}]
  %s1 = inlined_call_operand.hbm [shape: f32[1,1024], index: 1, kind: input, shape index: {}]
  %s2 = inlined_call_operand.hbm [shape: f32[1,1024], index: 2, kind: input, shape index: {}]
  %s3 = inlined_call_operand.hbm [shape: bf16[1024,512], index: 3, kind: input, shape index: {}]
  %s4 = inlined_call_operand.hbm [shape: f32[1,512], index: 4, kind: input, shape index: {}]
  %s5 = inlined_call_operand.hbm [shape: bf16[512,128], index: 5, kind: input, shape index: {}]
  %s6 = inlined_call_operand.vmem [shape: f32[1,128], index: 6, kind: input, shape index: {}]
  %s7 = inlined_call_operand.hbm [shape: bf16[128,128], index: 7, kind: input, shape index: {}]
  %s8 = inlined_call_operand.vmem [shape: f32[1,128], index: 8, kind: input, shape index: {}]
  %s9 = inlined_call_operand.hbm [shape: f32[8,128], index: 9, kind: output, shape index: {}]
  %s10 = sld [smem:[#allocation0]]
  $region82: #{tpu_custom_call.1} parent=0
    _
  %s12 = ssub.s32 1, %s10
  %s13 = scalar_select 0, %s12, %s10
  $region1: #{tpu_custom_call.1} parent=0
    #allocation3 [shape = 'u8[8192]{0}', space=vmem, size = 0x2000, scoped, tag = 'input window, operand 0, single buffered']
    #allocation4 [shape = 's32[1]{0}', space=sflag, size = 0x4, scoped, tag = 'scoped memory for tpu_custom_call.1']
    #allocation5 [shape = 's32[1]{0}', space=sflag, size = 0x4, scoped, tag = 'scoped memory for tpu_custom_call.1']
    #allocation6 [shape = 'u8[4096]{0}', space=vmem, size = 0x1000, scoped, tag = 'input window, operand 1, single buffered']
    #allocation7 [shape = 's32[1]{0}', space=sflag, size = 0x4, scoped, tag = 'scoped memory for tpu_custom_call.1']
    #allocation8 [shape = 'u8[4096]{0}', space=vmem, size = 0x1000, scoped, tag = 'input window, operand 2, single buffered']
    #allocation9 [shape = 'u8[1048576]{0}', space=vmem, size = 0x100000, scoped, tag = 'input window, operand 3, single buffered']
    #allocation10 [shape = 's32[1]{0}', space=sflag, size = 0x4, scoped, tag = 'scoped memory for tpu_custom_call.1']
    #allocation11 [shape = 'u8[2048]{0}', space=vmem, size = 0x800, scoped, tag = 'input window, operand 4, single buffered']
    #allocation12 [shape = 'u8[131072]{0}', space=vmem, size = 0x20000, scoped, tag = 'input window, operand 5, single buffered']
    #allocation13 [shape = 's32[1]{0}', space=sflag, size = 0x4, scoped, tag = 'scoped memory for tpu_custom_call.1']
    #allocation14 [shape = 'u8[32768]{0}', space=vmem, size = 0x8000, scoped, tag = 'input window, operand 7, single buffered']
    #allocation15 [shape = 'u8[4096]{0}', space=vmem, size = 0x1000, scoped, tag = 'output window, operand 0, single buffered']
    %14 = vsyncpa [#allocation4], 0
    %15 = vsyncpa [#allocation7], 0
    %16 = vsyncpa [#allocation10], 0
    %17 = vsyncpa [#allocation13], 0
    %18 = vsyncpa [#allocation5], 0
    // Predicated region
    $region2: #{tpu_custom_call.1} parent=1 // pred_check
      _
    $region3: #{tpu_custom_call.1} parent=1 // pred_check_branch
      %20 = sbr.rel (0) target = $region5
    $region4: #{tpu_custom_call.1} parent=1 // pred_region
      %22 = vsyncadd [#allocation4], 0
      %s24 = sshll.u32 %s0, 4
      %s25 = int_to_ptr.hbm [resolvable:$true] %s24
      %s26 = sshll.u32 [#allocation3], 4
      %s27 = int_to_ptr.vmem [resolvable:$true] %s26
      %29 = dma.hbm_to_vmem [thread:$0]  %s25, 256, %s27, [#allocation4]
    $region5: #{tpu_custom_call.1} parent=1 // pred_fallthru
      _
    // Predicated region
    $region6: #{tpu_custom_call.1} parent=1 // pred_check
      _
    $region7: #{tpu_custom_call.1} parent=1 // pred_check_branch
      %31 = sbr.rel (0) target = $region9
    $region8: #{tpu_custom_call.1} parent=1 // pred_region
      %33 = vsyncadd [#allocation7], 0
      %s35 = sshll.u32 %s1, 4
      %s36 = int_to_ptr.hbm [resolvable:$true] %s35
      %s37 = sshll.u32 [#allocation6], 4
      %s38 = int_to_ptr.vmem [resolvable:$true] %s37
      %40 = dma.hbm_to_vmem [thread:$0]  %s36, 128, %s38, [#allocation7]
    $region9: #{tpu_custom_call.1} parent=1 // pred_fallthru
      _
    // Predicated region
    $region10: #{tpu_custom_call.1} parent=1 // pred_check
      _
    $region11: #{tpu_custom_call.1} parent=1 // pred_check_branch
      %42 = sbr.rel (0) target = $region13
    $region12: #{tpu_custom_call.1} parent=1 // pred_region
      %44 = vsyncadd [#allocation7], 0
      %s46 = sshll.u32 %s2, 4
      %s47 = int_to_ptr.hbm [resolvable:$true] %s46
      %s48 = sshll.u32 [#allocation8], 4
      %s49 = int_to_ptr.vmem [resolvable:$true] %s48
      %51 = dma.hbm_to_vmem [thread:$0]  %s47, 128, %s49, [#allocation7]
    $region13: #{tpu_custom_call.1} parent=1 // pred_fallthru
      _
    // Predicated region
    $region14: #{tpu_custom_call.1} parent=1 // pred_check
      _
    $region15: #{tpu_custom_call.1} parent=1 // pred_check_branch
      %53 = sbr.rel (0) target = $region17
    $region16: #{tpu_custom_call.1} parent=1 // pred_region
      %55 = vsyncadd [#allocation10], 0
      %s56 = sshll.u32 %s3, 4
      %s57 = int_to_ptr.hbm [resolvable:$true] %s56
      %s58 = sshll.u32 [#allocation9], 4
      %s59 = int_to_ptr.vmem [resolvable:$true] %s58
      %64 = dma.hbm_to_vmem [thread:$0]  %s57, 32768, %s59, [#allocation10], 256, 256, 16
    $region17: #{tpu_custom_call.1} parent=1 // pred_fallthru
      _
    // Predicated region
    $region18: #{tpu_custom_call.1} parent=1 // pred_check
      _
    $region19: #{tpu_custom_call.1} parent=1 // pred_check_branch
      %66 = sbr.rel (0) target = $region21
    $region20: #{tpu_custom_call.1} parent=1 // pred_region
      %68 = vsyncadd [#allocation10], 0
      %s70 = sshll.u32 %s4, 4
      %s71 = int_to_ptr.hbm [resolvable:$true] %s70
      %s72 = sshll.u32 [#allocation11], 4
      %s73 = int_to_ptr.vmem [resolvable:$true] %s72
      %75 = dma.hbm_to_vmem [thread:$0]  %s71, 64, %s73, [#allocation10]
    $region21: #{tpu_custom_call.1} parent=1 // pred_fallthru
      _
    // Predicated region
    $region22: #{tpu_custom_call.1} parent=1 // pred_check
      _
    $region23: #{tpu_custom_call.1} parent=1 // pred_check_branch
      %77 = sbr.rel (0) target = $region25
    $region24: #{tpu_custom_call.1} parent=1 // pred_region
      %79 = vsyncadd [#allocation13], 0
      %s80 = sshll.u32 %s5, 4
      %s81 = int_to_ptr.hbm [resolvable:$true] %s80
      %s82 = sshll.u32 [#allocation12], 4
      %s83 = int_to_ptr.vmem [resolvable:$true] %s82
      %88 = dma.hbm_to_vmem [thread:$0]  %s81, 4096, %s83, [#allocation13], 64, 64, 4
    $region25: #{tpu_custom_call.1} parent=1 // pred_fallthru
      _
    // Predicated region
    $region26: #{tpu_custom_call.1} parent=1 // pred_check
      _
    $region27: #{tpu_custom_call.1} parent=1 // pred_check_branch
      %90 = sbr.rel (0) target = $region29
    $region28: #{tpu_custom_call.1} parent=1 // pred_region
      _
    $region29: #{tpu_custom_call.1} parent=1 // pred_fallthru
      _
    // Predicated region
    $region30: #{tpu_custom_call.1} parent=1 // pred_check
      _
    $region31: #{tpu_custom_call.1} parent=1 // pred_check_branch
      %92 = sbr.rel (0) target = $region33
    $region32: #{tpu_custom_call.1} parent=1 // pred_region
      %94 = vsyncadd [#allocation13], 0
      %s95 = sshll.u32 %s7, 4
      %s96 = int_to_ptr.hbm [resolvable:$true] %s95
      %s97 = sshll.u32 [#allocation14], 4
      %s98 = int_to_ptr.vmem [resolvable:$true] %s97
      %103 = dma.hbm_to_vmem [thread:$0]  %s96, 1024, %s98, [#allocation13], 64, 64, 4
    $region33: #{tpu_custom_call.1} parent=1 // pred_fallthru
      _
    // Predicated region
    $region34: #{tpu_custom_call.1} parent=1 // pred_check
      _
    $region35: #{tpu_custom_call.1} parent=1 // pred_check_branch
      %105 = sbr.rel (0) target = $region37
    $region36: #{tpu_custom_call.1} parent=1 // pred_region
      _
    $region37: #{tpu_custom_call.1} parent=1 // pred_fallthru
      _
    // Predicated region
    $region38: #{tpu_custom_call.1} parent=1 // pred_check
      _
    $region39: #{tpu_custom_call.1} parent=1 // pred_check_branch
      %107 = sbr.rel (0) target = $region41
    $region40: #{tpu_custom_call.1} parent=1 // pred_region
      %109 = dma.done [#allocation4], 256
    $region41: #{tpu_custom_call.1} parent=1 // pred_fallthru
      _
    // Predicated region
    $region42: #{tpu_custom_call.1} parent=1 // pred_check
      _
    $region43: #{tpu_custom_call.1} parent=1 // pred_check_branch
      %111 = sbr.rel (0) target = $region45
    $region44: #{tpu_custom_call.1} parent=1 // pred_region
      %113 = dma.done [#allocation7], 128
    $region45: #{tpu_custom_call.1} parent=1 // pred_fallthru
      _
    // Predicated region
    $region46: #{tpu_custom_call.1} parent=1 // pred_check
      _
    $region47: #{tpu_custom_call.1} parent=1 // pred_check_branch
      %115 = sbr.rel (0) target = $region49
    $region48: #{tpu_custom_call.1} parent=1 // pred_region
      %117 = dma.done [#allocation7], 128
    $region49: #{tpu_custom_call.1} parent=1 // pred_fallthru
      _
    // Predicated region
    $region50: #{tpu_custom_call.1} parent=1 // pred_check
      _
    $region51: #{tpu_custom_call.1} parent=1 // pred_check_branch
      %119 = sbr.rel (0) target = $region53
    $region52: #{tpu_custom_call.1} parent=1 // pred_region
      %121 = dma.done [#allocation10], 32768
    $region53: #{tpu_custom_call.1} parent=1 // pred_fallthru
      _
    // Predicated region
    $region54: #{tpu_custom_call.1} parent=1 // pred_check
      _
    $region55: #{tpu_custom_call.1} parent=1 // pred_check_branch
      %123 = sbr.rel (0) target = $region57
    $region56: #{tpu_custom_call.1} parent=1 // pred_region
      %125 = dma.done [#allocation10], 64
    $region57: #{tpu_custom_call.1} parent=1 // pred_fallthru
      _
    // Predicated region
    $region58: #{tpu_custom_call.1} parent=1 // pred_check
      _
    $region59: #{tpu_custom_call.1} parent=1 // pred_check_branch
      %127 = sbr.rel (0) target = $region61
    $region60: #{tpu_custom_call.1} parent=1 // pred_region
      %129 = dma.done [#allocation13], 4096
    $region61: #{tpu_custom_call.1} parent=1 // pred_fallthru
      _
    // Predicated region
    $region62: #{tpu_custom_call.1} parent=1 // pred_check
      _
    $region63: #{tpu_custom_call.1} parent=1 // pred_check_branch
      %131 = sbr.rel (0) target = $region65
    $region64: #{tpu_custom_call.1} parent=1 // pred_region
      %133 = dma.done [#allocation13], 1024
    $region65: #{tpu_custom_call.1} parent=1 // pred_fallthru
      _
    %p134 = scmp.eq.s32.totalorder 0, 0
    // Predicated region
    $region66: #{tpu_custom_call.1} parent=1 // pred_check
      %p135 = pneg %p134
    $region67: #{tpu_custom_call.1} parent=1 // pred_check_branch
      %137 = sbr.rel (%p135) target = $region69
    $region68: #{tpu_custom_call.1} parent=1 // pred_region
      %vm138 = vcmask 7168
      %139 = vst.msk [vmem:[#allocation2] sm:$0xff] %vm138, 0.0
    $region69: #{tpu_custom_call.1} parent=1 // pred_fallthru
      _
    %v140 = vld [vmem:[#allocation2] sm:$0xff]
    %v141 = vld [vmem:[#allocation3] sm:$0xff]
    %v142 = vld [vmem:[#allocation3 + $0x8] sm:$0xff]
    %v143 = vadd.f32 %v141, %v142
    %144 = vadd.xlane.f32.xlu0 %v143
    %v145 = vpop.xlane.xlu0 %144
    %v146 = vadd.f32 %v140, %v145
    %vm147 = vcmask 7168
    %148 = vst.msk [vmem:[#allocation2] sm:$0xff] %vm147, %v146
    // Predicated region
    $region70: #{tpu_custom_call.1} parent=1 // pred_check
      %p149 = pneg %p134
    $region71: #{tpu_custom_call.1} parent=1 // pred_check_branch
      %151 = sbr.rel (%p149) target = $region73
    $region72: #{tpu_custom_call.1} parent=1 // pred_region
      %v152 = vld [vmem:[#allocation2] sm:$0xff]
      %v153 = vld [vmem:[#allocation8] sm:$0xff]
      %v154 = vld [vmem:[#allocation6] sm:$0xff]
      %156 = vset.pattern.permute.xlu0 0
      %157 = vperm.xlu0 %156, %v152
      %v158 = vpop.permute.xlu0 %157
      %v161 = vperm.slane %v154, 0
      %v162 = vperm.slane %v154, 1
      %v163 = vperm.slane %v154, 2
      %v164 = vperm.slane %v154, 3
      %v165 = vperm.slane %v154, 4
      %v166 = vperm.slane %v154, 5
      %v167 = vperm.slane %v154, 6
      %v168 = vperm.slane %v154, 7
      %v177 = vmul.f32 %v158, %v161
      %v178 = vmul.f32 %v158, %v162
      %v179 = vmul.f32 %v158, %v163
      %v180 = vmul.f32 %v158, %v164
      %v181 = vmul.f32 %v158, %v165
      %v182 = vmul.f32 %v158, %v166
      %v183 = vmul.f32 %v158, %v167
      %v184 = vmul.f32 %v158, %v168
      %v186 = vperm.slane %v153, 0
      %v187 = vperm.slane %v153, 1
      %v188 = vperm.slane %v153, 2
      %v189 = vperm.slane %v153, 3
      %v190 = vperm.slane %v153, 4
      %v191 = vperm.slane %v153, 5
      %v192 = vperm.slane %v153, 6
      %v193 = vperm.slane %v153, 7
      %v202 = vadd.f32 %v186, %v177
      %v203 = vadd.f32 %v187, %v178
      %v204 = vadd.f32 %v188, %v179
      %v205 = vadd.f32 %v189, %v180
      %v206 = vadd.f32 %v190, %v181
      %v207 = vadd.f32 %v191, %v182
      %v208 = vadd.f32 %v192, %v183
      %v209 = vadd.f32 %v193, %v184
      %v210 = vmax.f32 %v202, 0.0
      %v211 = vmax.f32 %v203, 0.0
      %v212 = vmax.f32 %v204, 0.0
      %v213 = vmax.f32 %v205, 0.0
      %v214 = vmax.f32 %v206, 0.0
      %v215 = vmax.f32 %v207, 0.0
      %v216 = vmax.f32 %v208, 0.0
      %v217 = vmax.f32 %v209, 0.0
      %v218 = vpack.c.bf16 %v210, %v210
      %v219 = vpack.c.bf16 %v211, %v211
      %v220 = vpack.c.bf16 %v212, %v212
      %v221 = vpack.c.bf16 %v213, %v213
      %v222 = vpack.c.bf16 %v214, %v214
      %v223 = vpack.c.bf16 %v215, %v215
      %v224 = vpack.c.bf16 %v216, %v216
      %v225 = vpack.c.bf16 %v217, %v217
      %v226 = vld [vmem:[#allocation9] sm:$0xff]
      %v227 = vld [vmem:[#allocation9 + $0x8] sm:$0xff]
      %v228 = vld [vmem:[#allocation9 + $0x10] sm:$0xff]
      %v229 = vld [vmem:[#allocation9 + $0x18] sm:$0xff]
      %v230 = vld [vmem:[#allocation9 + $0x20] sm:$0xff]
      %v231 = vld [vmem:[#allocation9 + $0x28] sm:$0xff]
      %v232 = vld [vmem:[#allocation9 + $0x30] sm:$0xff]
      %v233 = vld [vmem:[#allocation9 + $0x38] sm:$0xff]
      %v234 = vld [vmem:[#allocation9 + $0x40] sm:$0xff]
      %v235 = vld [vmem:[#allocation9 + $0x48] sm:$0xff]
      %v236 = vld [vmem:[#allocation9 + $0x50] sm:$0xff]
      %v237 = vld [vmem:[#allocation9 + $0x58] sm:$0xff]
      %v238 = vld [vmem:[#allocation9 + $0x60] sm:$0xff]
      %v239 = vld [vmem:[#allocation9 + $0x68] sm:$0xff]
      %v240 = vld [vmem:[#allocation9 + $0x70] sm:$0xff]
      %v241 = vld [vmem:[#allocation9 + $0x78] sm:$0xff]
      %v242 = vld [vmem:[#allocation9 + $0x80] sm:$0xff]
      %v243 = vld [vmem:[#allocation9 + $0x88] sm:$0xff]
      %v244 = vld [vmem:[#allocation9 + $0x90] sm:$0xff]
      %v245 = vld [vmem:[#allocation9 + $0x98] sm:$0xff]
      %v246 = vld [vmem:[#allocation9 + $0xa0] sm:$0xff]
      %v247 = vld [vmem:[#allocation9 + $0xa8] sm:$0xff]
      %v248 = vld [vmem:[#allocation9 + $0xb0] sm:$0xff]
      %v249 = vld [vmem:[#allocation9 + $0xb8] sm:$0xff]
      %v250 = vld [vmem:[#allocation9 + $0xc0] sm:$0xff]
      %v251 = vld [vmem:[#allocation9 + $0xc8] sm:$0xff]
      %v252 = vld [vmem:[#allocation9 + $0xd0] sm:$0xff]
      %v253 = vld [vmem:[#allocation9 + $0xd8] sm:$0xff]
      %v254 = vld [vmem:[#allocation9 + $0xe0] sm:$0xff]
      %v255 = vld [vmem:[#allocation9 + $0xe8] sm:$0xff]
      %v256 = vld [vmem:[#allocation9 + $0xf0] sm:$0xff]
      %v257 = vld [vmem:[#allocation9 + $0xf8] sm:$0xff]
      %v258 = vld [vmem:[#allocation9 + $0x100] sm:$0xff]
      %v259 = vld [vmem:[#allocation9 + $0x108] sm:$0xff]
      %v260 = vld [vmem:[#allocation9 + $0x110] sm:$0xff]
      %v261 = vld [vmem:[#allocation9 + $0x118] sm:$0xff]
      %v262 = vld [vmem:[#allocation9 + $0x120] sm:$0xff]
      %v263 = vld [vmem:[#allocation9 + $0x128] sm:$0xff]
      %v264 = vld [vmem:[#allocation9 + $0x130] sm:$0xff]
      %v265 = vld [vmem:[#allocation9 + $0x138] sm:$0xff]
      %v266 = vld [vmem:[#allocation9 + $0x140] sm:$0xff]
      %v267 = vld [vmem:[#allocation9 + $0x148] sm:$0xff]
      %v268 = vld [vmem:[#allocation9 + $0x150] sm:$0xff]
      %v269 = vld [vmem:[#allocation9 + $0x158] sm:$0xff]
      %v270 = vld [vmem:[#allocation9 + $0x160] sm:$0xff]
      %v271 = vld [vmem:[#allocation9 + $0x168] sm:$0xff]
      %v272 = vld [vmem:[#allocation9 + $0x170] sm:$0xff]
      %v273 = vld [vmem:[#allocation9 + $0x178] sm:$0xff]
      %v274 = vld [vmem:[#allocation9 + $0x180] sm:$0xff]
      %v275 = vld [vmem:[#allocation9 + $0x188] sm:$0xff]
      %v276 = vld [vmem:[#allocation9 + $0x190] sm:$0xff]
      %v277 = vld [vmem:[#allocation9 + $0x198] sm:$0xff]
      %v278 = vld [vmem:[#allocation9 + $0x1a0] sm:$0xff]
      %v279 = vld [vmem:[#allocation9 + $0x1a8] sm:$0xff]
      %v280 = vld [vmem:[#allocation9 + $0x1b0] sm:$0xff]
      %v281 = vld [vmem:[#allocation9 + $0x1b8] sm:$0xff]
      %v282 = vld [vmem:[#allocation9 + $0x1c0] sm:$0xff]
      %v283 = vld [vmem:[#allocation9 + $0x1c8] sm:$0xff]
      %v284 = vld [vmem:[#allocation9 + $0x1d0] sm:$0xff]
      %v285 = vld [vmem:[#allocation9 + $0x1d8] sm:$0xff]
      %v286 = vld [vmem:[#allocation9 + $0x1e0] sm:$0xff]
      %v287 = vld [vmem:[#allocation9 + $0x1e8] sm:$0xff]
      %v288 = vld [vmem:[#allocation9 + $0x1f0] sm:$0xff]
      %v289 = vld [vmem:[#allocation9 + $0x1f8] sm:$0xff]
      %v290 = vld [vmem:[#allocation9 + $0x200] sm:$0xff]
      %v291 = vld [vmem:[#allocation9 + $0x208] sm:$0xff]
      %v292 = vld [vmem:[#allocation9 + $0x210] sm:$0xff]
      %v293 = vld [vmem:[#allocation9 + $0x218] sm:$0xff]
      %v294 = vld [vmem:[#allocation9 + $0x220] sm:$0xff]
      %v295 = vld [vmem:[#allocation9 + $0x228] sm:$0xff]
      %v296 = vld [vmem:[#allocation9 + $0x230] sm:$0xff]
      %v297 = vld [vmem:[#allocation9 + $0x238] sm:$0xff]
      %v298 = vld [vmem:[#allocation9 + $0x240] sm:$0xff]
      %v299 = vld [vmem:[#allocation9 + $0x248] sm:$0xff]
      %v300 = vld [vmem:[#allocation9 + $0x250] sm:$0xff]
      %v301 = vld [vmem:[#allocation9 + $0x258] sm:$0xff]
      %v302 = vld [vmem:[#allocation9 + $0x260] sm:$0xff]
      %v303 = vld [vmem:[#allocation9 + $0x268] sm:$0xff]
      %v304 = vld [vmem:[#allocation9 + $0x270] sm:$0xff]
      %v305 = vld [vmem:[#allocation9 + $0x278] sm:$0xff]
      %v306 = vld [vmem:[#allocation9 + $0x280] sm:$0xff]
      %v307 = vld [vmem:[#allocation9 + $0x288] sm:$0xff]
      %v308 = vld [vmem:[#allocation9 + $0x290] sm:$0xff]
      %v309 = vld [vmem:[#allocation9 + $0x298] sm:$0xff]
      %v310 = vld [vmem:[#allocation9 + $0x2a0] sm:$0xff]
      %v311 = vld [vmem:[#allocation9 + $0x2a8] sm:$0xff]
      %v312 = vld [vmem:[#allocation9 + $0x2b0] sm:$0xff]
      %v313 = vld [vmem:[#allocation9 + $0x2b8] sm:$0xff]
      %v314 = vld [vmem:[#allocation9 + $0x2c0] sm:$0xff]
      %v315 = vld [vmem:[#allocation9 + $0x2c8] sm:$0xff]
      %v316 = vld [vmem:[#allocation9 + $0x2d0] sm:$0xff]
      %v317 = vld [vmem:[#allocation9 + $0x2d8] sm:$0xff]
      %v318 = vld [vmem:[#allocation9 + $0x2e0] sm:$0xff]
      %v319 = vld [vmem:[#allocation9 + $0x2e8] sm:$0xff]
      %v320 = vld [vmem:[#allocation9 + $0x2f0] sm:$0xff]
      %v321 = vld [vmem:[#allocation9 + $0x2f8] sm:$0xff]
      %v322 = vld [vmem:[#allocation9 + $0x300] sm:$0xff]
      %v323 = vld [vmem:[#allocation9 + $0x308] sm:$0xff]
      %v324 = vld [vmem:[#allocation9 + $0x310] sm:$0xff]
      %v325 = vld [vmem:[#allocation9 + $0x318] sm:$0xff]
      %v326 = vld [vmem:[#allocation9 + $0x320] sm:$0xff]
      %v327 = vld [vmem:[#allocation9 + $0x328] sm:$0xff]
      %v328 = vld [vmem:[#allocation9 + $0x330] sm:$0xff]
      %v329 = vld [vmem:[#allocation9 + $0x338] sm:$0xff]
      %v330 = vld [vmem:[#allocation9 + $0x340] sm:$0xff]
      %v331 = vld [vmem:[#allocation9 + $0x348] sm:$0xff]
      %v332 = vld [vmem:[#allocation9 + $0x350] sm:$0xff]
      %v333 = vld [vmem:[#allocation9 + $0x358] sm:$0xff]
      %v334 = vld [vmem:[#allocation9 + $0x360] sm:$0xff]
      %v335 = vld [vmem:[#allocation9 + $0x368] sm:$0xff]
      %v336 = vld [vmem:[#allocation9 + $0x370] sm:$0xff]
      %v337 = vld [vmem:[#allocation9 + $0x378] sm:$0xff]
      %v338 = vld [vmem:[#allocation9 + $0x380] sm:$0xff]
      %v339 = vld [vmem:[#allocation9 + $0x388] sm:$0xff]
      %v340 = vld [vmem:[#allocation9 + $0x390] sm:$0xff]
      %v341 = vld [vmem:[#allocation9 + $0x398] sm:$0xff]
      %v342 = vld [vmem:[#allocation9 + $0x3a0] sm:$0xff]
      %v343 = vld [vmem:[#allocation9 + $0x3a8] sm:$0xff]
      %v344 = vld [vmem:[#allocation9 + $0x3b0] sm:$0xff]
      %v345 = vld [vmem:[#allocation9 + $0x3b8] sm:$0xff]
      %v346 = vld [vmem:[#allocation9 + $0x3c0] sm:$0xff]
      %v347 = vld [vmem:[#allocation9 + $0x3c8] sm:$0xff]
      %v348 = vld [vmem:[#allocation9 + $0x3d0] sm:$0xff]
      %v349 = vld [vmem:[#allocation9 + $0x3d8] sm:$0xff]
      %v350 = vld [vmem:[#allocation9 + $0x3e0] sm:$0xff]
      %v351 = vld [vmem:[#allocation9 + $0x3e8] sm:$0xff]
      %v352 = vld [vmem:[#allocation9 + $0x3f0] sm:$0xff]
      %v353 = vld [vmem:[#allocation9 + $0x3f8] sm:$0xff]
      %v354 = vld [vmem:[#allocation9 + $0x400] sm:$0xff]
      %v355 = vld [vmem:[#allocation9 + $0x408] sm:$0xff]
      %v356 = vld [vmem:[#allocation9 + $0x410] sm:$0xff]
      %v357 = vld [vmem:[#allocation9 + $0x418] sm:$0xff]
      %v358 = vld [vmem:[#allocation9 + $0x420] sm:$0xff]
      %v359 = vld [vmem:[#allocation9 + $0x428] sm:$0xff]
      %v360 = vld [vmem:[#allocation9 + $0x430] sm:$0xff]
      %v361 = vld [vmem:[#allocation9 + $0x438] sm:$0xff]
      %v362 = vld [vmem:[#allocation9 + $0x440] sm:$0xff]
      %v363 = vld [vmem:[#allocation9 + $0x448] sm:$0xff]
      %v364 = vld [vmem:[#allocation9 + $0x450] sm:$0xff]
      %v365 = vld [vmem:[#allocation9 + $0x458] sm:$0xff]
      %v366 = vld [vmem:[#allocation9 + $0x460] sm:$0xff]
      %v367 = vld [vmem:[#allocation9 + $0x468] sm:$0xff]
      %v368 = vld [vmem:[#allocation9 + $0x470] sm:$0xff]
      %v369 = vld [vmem:[#allocation9 + $0x478] sm:$0xff]
      %v370 = vld [vmem:[#allocation9 + $0x480] sm:$0xff]
      %v371 = vld [vmem:[#allocation9 + $0x488] sm:$0xff]
      %v372 = vld [vmem:[#allocation9 + $0x490] sm:$0xff]
      %v373 = vld [vmem:[#allocation9 + $0x498] sm:$0xff]
      %v374 = vld [vmem:[#allocation9 + $0x4a0] sm:$0xff]
      %v375 = vld [vmem:[#allocation9 + $0x4a8] sm:$0xff]
      %v376 = vld [vmem:[#allocation9 + $0x4b0] sm:$0xff]
      %v377 = vld [vmem:[#allocation9 + $0x4b8] sm:$0xff]
      %v378 = vld [vmem:[#allocation9 + $0x4c0] sm:$0xff]
      %v379 = vld [vmem:[#allocation9 + $0x4c8] sm:$0xff]
      %v380 = vld [vmem:[#allocation9 + $0x4d0] sm:$0xff]
      %v381 = vld [vmem:[#allocation9 + $0x4d8] sm:$0xff]
      %v382 = vld [vmem:[#allocation9 + $0x4e0] sm:$0xff]
      %v383 = vld [vmem:[#allocation9 + $0x4e8] sm:$0xff]
      %v384 = vld [vmem:[#allocation9 + $0x4f0] sm:$0xff]
      %v385 = vld [vmem:[#allocation9 + $0x4f8] sm:$0xff]
      %v386 = vld [vmem:[#allocation9 + $0x500] sm:$0xff]
      %v387 = vld [vmem:[#allocation9 + $0x508] sm:$0xff]
      %v388 = vld [vmem:[#allocation9 + $0x510] sm:$0xff]
      %v389 = vld [vmem:[#allocation9 + $0x518] sm:$0xff]
      %v390 = vld [vmem:[#allocation9 + $0x520] sm:$0xff]
      %v391 = vld [vmem:[#allocation9 + $0x528] sm:$0xff]
      %v392 = vld [vmem:[#allocation9 + $0x530] sm:$0xff]
      %v393 = vld [vmem:[#allocation9 + $0x538] sm:$0xff]
      %v394 = vld [vmem:[#allocation9 + $0x540] sm:$0xff]
      %v395 = vld [vmem:[#allocation9 + $0x548] sm:$0xff]
      %v396 = vld [vmem:[#allocation9 + $0x550] sm:$0xff]
      %v397 = vld [vmem:[#allocation9 + $0x558] sm:$0xff]
      %v398 = vld [vmem:[#allocation9 + $0x560] sm:$0xff]
      %v399 = vld [vmem:[#allocation9 + $0x568] sm:$0xff]
      %v400 = vld [vmem:[#allocation9 + $0x570] sm:$0xff]
      %v401 = vld [vmem:[#allocation9 + $0x578] sm:$0xff]
      %v402 = vld [vmem:[#allocation9 + $0x580] sm:$0xff]
      %v403 = vld [vmem:[#allocation9 + $0x588] sm:$0xff]
      %v404 = vld [vmem:[#allocation9 + $0x590] sm:$0xff]
      %v405 = vld [vmem:[#allocation9 + $0x598] sm:$0xff]
      %v406 = vld [vmem:[#allocation9 + $0x5a0] sm:$0xff]
      %v407 = vld [vmem:[#allocation9 + $0x5a8] sm:$0xff]
      %v408 = vld [vmem:[#allocation9 + $0x5b0] sm:$0xff]
      %v409 = vld [vmem:[#allocation9 + $0x5b8] sm:$0xff]
      %v410 = vld [vmem:[#allocation9 + $0x5c0] sm:$0xff]
      %v411 = vld [vmem:[#allocation9 + $0x5c8] sm:$0xff]
      %v412 = vld [vmem:[#allocation9 + $0x5d0] sm:$0xff]
      %v413 = vld [vmem:[#allocation9 + $0x5d8] sm:$0xff]
      %v414 = vld [vmem:[#allocation9 + $0x5e0] sm:$0xff]
      %v415 = vld [vmem:[#allocation9 + $0x5e8] sm:$0xff]
      %v416 = vld [vmem:[#allocation9 + $0x5f0] sm:$0xff]
      %v417 = vld [vmem:[#allocation9 + $0x5f8] sm:$0xff]
      %v418 = vld [vmem:[#allocation9 + $0x600] sm:$0xff]
      %v419 = vld [vmem:[#allocation9 + $0x608] sm:$0xff]
      %v420 = vld [vmem:[#allocation9 + $0x610] sm:$0xff]
      %v421 = vld [vmem:[#allocation9 + $0x618] sm:$0xff]
      %v422 = vld [vmem:[#allocation9 + $0x620] sm:$0xff]
      %v423 = vld [vmem:[#allocation9 + $0x628] sm:$0xff]
      %v424 = vld [vmem:[#allocation9 + $0x630] sm:$0xff]
      %v425 = vld [vmem:[#allocation9 + $0x638] sm:$0xff]
      %v426 = vld [vmem:[#allocation9 + $0x640] sm:$0xff]
      %v427 = vld [vmem:[#allocation9 + $0x648] sm:$0xff]
      %v428 = vld [vmem:[#allocation9 + $0x650] sm:$0xff]
      %v429 = vld [vmem:[#allocation9 + $0x658] sm:$0xff]
      %v430 = vld [vmem:[#allocation9 + $0x660] sm:$0xff]
      %v431 = vld [vmem:[#allocation9 + $0x668] sm:$0xff]
      %v432 = vld [vmem:[#allocation9 + $0x670] sm:$0xff]
      %v433 = vld [vmem:[#allocation9 + $0x678] sm:$0xff]
      %v434 = vld [vmem:[#allocation9 + $0x680] sm:$0xff]
      %v435 = vld [vmem:[#allocation9 + $0x688] sm:$0xff]
      %v436 = vld [vmem:[#allocation9 + $0x690] sm:$0xff]
      %v437 = vld [vmem:[#allocation9 + $0x698] sm:$0xff]
      %v438 = vld [vmem:[#allocation9 + $0x6a0] sm:$0xff]
      %v439 = vld [vmem:[#allocation9 + $0x6a8] sm:$0xff]
      %v440 = vld [vmem:[#allocation9 + $0x6b0] sm:$0xff]
      %v441 = vld [vmem:[#allocation9 + $0x6b8] sm:$0xff]
      %v442 = vld [vmem:[#allocation9 + $0x6c0] sm:$0xff]
      %v443 = vld [vmem:[#allocation9 + $0x6c8] sm:$0xff]
      %v444 = vld [vmem:[#allocation9 + $0x6d0] sm:$0xff]
      %v445 = vld [vmem:[#allocation9 + $0x6d8] sm:$0xff]
      %v446 = vld [vmem:[#allocation9 + $0x6e0] sm:$0xff]
      %v447 = vld [vmem:[#allocation9 + $0x6e8] sm:$0xff]
      %v448 = vld [vmem:[#allocation9 + $0x6f0] sm:$0xff]
      %v449 = vld [vmem:[#allocation9 + $0x6f8] sm:$0xff]
      %v450 = vld [vmem:[#allocation9 + $0x700] sm:$0xff]
      %v451 = vld [vmem:[#allocation9 + $0x708] sm:$0xff]
      %v452 = vld [vmem:[#allocation9 + $0x710] sm:$0xff]
      %v453 = vld [vmem:[#allocation9 + $0x718] sm:$0xff]
      %v454 = vld [vmem:[#allocation9 + $0x720] sm:$0xff]
      %v455 = vld [vmem:[#allocation9 + $0x728] sm:$0xff]
      %v456 = vld [vmem:[#allocation9 + $0x730] sm:$0xff]
      %v457 = vld [vmem:[#allocation9 + $0x738] sm:$0xff]
      %v458 = vld [vmem:[#allocation9 + $0x740] sm:$0xff]
      %v459 = vld [vmem:[#allocation9 + $0x748] sm:$0xff]
      %v460 = vld [vmem:[#allocation9 + $0x750] sm:$0xff]
      %v461 = vld [vmem:[#allocation9 + $0x758] sm:$0xff]
      %v462 = vld [vmem:[#allocation9 + $0x760] sm:$0xff]
      %v463 = vld [vmem:[#allocation9 + $0x768] sm:$0xff]
      %v464 = vld [vmem:[#allocation9 + $0x770] sm:$0xff]
      %v465 = vld [vmem:[#allocation9 + $0x778] sm:$0xff]
      %v466 = vld [vmem:[#allocation9 + $0x780] sm:$0xff]
      %v467 = vld [vmem:[#allocation9 + $0x788] sm:$0xff]
      %v468 = vld [vmem:[#allocation9 + $0x790] sm:$0xff]
      %v469 = vld [vmem:[#allocation9 + $0x798] sm:$0xff]
      %v470 = vld [vmem:[#allocation9 + $0x7a0] sm:$0xff]
      %v471 = vld [vmem:[#allocation9 + $0x7a8] sm:$0xff]
      %v472 = vld [vmem:[#allocation9 + $0x7b0] sm:$0xff]
      %v473 = vld [vmem:[#allocation9 + $0x7b8] sm:$0xff]
      %v474 = vld [vmem:[#allocation9 + $0x7c0] sm:$0xff]
      %v475 = vld [vmem:[#allocation9 + $0x7c8] sm:$0xff]
      %v476 = vld [vmem:[#allocation9 + $0x7d0] sm:$0xff]
      %v477 = vld [vmem:[#allocation9 + $0x7d8] sm:$0xff]
      %v478 = vld [vmem:[#allocation9 + $0x7e0] sm:$0xff]
      %v479 = vld [vmem:[#allocation9 + $0x7e8] sm:$0xff]
      %v480 = vld [vmem:[#allocation9 + $0x7f0] sm:$0xff]
      %v481 = vld [vmem:[#allocation9 + $0x7f8] sm:$0xff]
      %v482 = vld [vmem:[#allocation11] sm:$0xf]
      %v484 = vperm.slane %v482, 0
      %v485 = vperm.slane %v482, 1
      %v486 = vperm.slane %v482, 2
      %v487 = vperm.slane %v482, 3
      %v748 = vunpack.c.l.b16 %v226
      %v749 = vunpack.c.h.b16 %v226
      %v750 = vunpack.c.l.b16 %v227
      %v751 = vunpack.c.h.b16 %v227
      %v752 = vunpack.c.l.b16 %v228
      %v753 = vunpack.c.h.b16 %v228
      %v754 = vunpack.c.l.b16 %v229
      %v755 = vunpack.c.h.b16 %v229
      %v756 = vunpack.c.l.b16 %v230
      %v757 = vunpack.c.h.b16 %v230
      %v758 = vunpack.c.l.b16 %v231
      %v759 = vunpack.c.h.b16 %v231
      %v760 = vunpack.c.l.b16 %v232
      %v761 = vunpack.c.h.b16 %v232
      %v762 = vunpack.c.l.b16 %v233
      %v763 = vunpack.c.h.b16 %v233
      %v764 = vunpack.c.l.b16 %v234
      %v765 = vunpack.c.h.b16 %v234
      %v766 = vunpack.c.l.b16 %v235
      %v767 = vunpack.c.h.b16 %v235
      %v768 = vunpack.c.l.b16 %v236
      %v769 = vunpack.c.h.b16 %v236
      %v770 = vunpack.c.l.b16 %v237
      %v771 = vunpack.c.h.b16 %v237
      %v772 = vunpack.c.l.b16 %v238
      %v773 = vunpack.c.h.b16 %v238
      %v774 = vunpack.c.l.b16 %v239
      %v775 = vunpack.c.h.b16 %v239
      %v776 = vunpack.c.l.b16 %v240
      %v777 = vunpack.c.h.b16 %v240
      %v778 = vunpack.c.l.b16 %v241
      %v779 = vunpack.c.h.b16 %v241
      %v780 = vunpack.c.l.b16 %v242
      %v781 = vunpack.c.h.b16 %v242
      %v782 = vunpack.c.l.b16 %v243
      %v783 = vunpack.c.h.b16 %v243
      %v784 = vunpack.c.l.b16 %v244
      %v785 = vunpack.c.h.b16 %v244
      %v786 = vunpack.c.l.b16 %v245
      %v787 = vunpack.c.h.b16 %v245
      %v788 = vunpack.c.l.b16 %v246
      %v789 = vunpack.c.h.b16 %v246
      %v790 = vunpack.c.l.b16 %v247
      %v791 = vunpack.c.h.b16 %v247
      %v792 = vunpack.c.l.b16 %v248
      %v793 = vunpack.c.h.b16 %v248
      %v794 = vunpack.c.l.b16 %v249
      %v795 = vunpack.c.h.b16 %v249
      %v796 = vunpack.c.l.b16 %v250
      %v797 = vunpack.c.h.b16 %v250
      %v798 = vunpack.c.l.b16 %v251
      %v799 = vunpack.c.h.b16 %v251
      %v800 = vunpack.c.l.b16 %v252
      %v801 = vunpack.c.h.b16 %v252
      %v802 = vunpack.c.l.b16 %v253
      %v803 = vunpack.c.h.b16 %v253
      %v804 = vunpack.c.l.b16 %v254
      %v805 = vunpack.c.h.b16 %v254
      %v806 = vunpack.c.l.b16 %v255
      %v807 = vunpack.c.h.b16 %v255
      %v808 = vunpack.c.l.b16 %v256
      %v809 = vunpack.c.h.b16 %v256
      %v810 = vunpack.c.l.b16 %v257
      %v811 = vunpack.c.h.b16 %v257
      %v812 = vunpack.c.l.b16 %v258
      %v813 = vunpack.c.h.b16 %v258
      %v814 = vunpack.c.l.b16 %v259
      %v815 = vunpack.c.h.b16 %v259
      %v816 = vunpack.c.l.b16 %v260
      %v817 = vunpack.c.h.b16 %v260
      %v818 = vunpack.c.l.b16 %v261
      %v819 = vunpack.c.h.b16 %v261
      %v820 = vunpack.c.l.b16 %v262
      %v821 = vunpack.c.h.b16 %v262
      %v822 = vunpack.c.l.b16 %v263
      %v823 = vunpack.c.h.b16 %v263
      %v824 = vunpack.c.l.b16 %v264
      %v825 = vunpack.c.h.b16 %v264
      %v826 = vunpack.c.l.b16 %v265
      %v827 = vunpack.c.h.b16 %v265
      %v828 = vunpack.c.l.b16 %v266
      %v829 = vunpack.c.h.b16 %v266
      %v830 = vunpack.c.l.b16 %v267
      %v831 = vunpack.c.h.b16 %v267
      %v832 = vunpack.c.l.b16 %v268
      %v833 = vunpack.c.h.b16 %v268
      %v834 = vunpack.c.l.b16 %v269
      %v835 = vunpack.c.h.b16 %v269
      %v836 = vunpack.c.l.b16 %v270
      %v837 = vunpack.c.h.b16 %v270
      %v838 = vunpack.c.l.b16 %v271
      %v839 = vunpack.c.h.b16 %v271
      %v840 = vunpack.c.l.b16 %v272
      %v841 = vunpack.c.h.b16 %v272
      %v842 = vunpack.c.l.b16 %v273
      %v843 = vunpack.c.h.b16 %v273
      %v844 = vunpack.c.l.b16 %v274
      %v845 = vunpack.c.h.b16 %v274
      %v846 = vunpack.c.l.b16 %v275
      %v847 = vunpack.c.h.b16 %v275
      %v848 = vunpack.c.l.b16 %v276
      %v849 = vunpack.c.h.b16 %v276
      %v850 = vunpack.c.l.b16 %v277
      %v851 = vunpack.c.h.b16 %v277
      %v852 = vunpack.c.l.b16 %v278
      %v853 = vunpack.c.h.b16 %v278
      %v854 = vunpack.c.l.b16 %v279
      %v855 = vunpack.c.h.b16 %v279
      %v856 = vunpack.c.l.b16 %v280
      %v857 = vunpack.c.h.b16 %v280
      %v858 = vunpack.c.l.b16 %v281
      %v859 = vunpack.c.h.b16 %v281
      %v860 = vunpack.c.l.b16 %v282
      %v861 = vunpack.c.h.b16 %v282
      %v862 = vunpack.c.l.b16 %v283
      %v863 = vunpack.c.h.b16 %v283
      %v864 = vunpack.c.l.b16 %v284
      %v865 = vunpack.c.h.b16 %v284
      %v866 = vunpack.c.l.b16 %v285
      %v867 = vunpack.c.h.b16 %v285
      %v868 = vunpack.c.l.b16 %v286
      %v869 = vunpack.c.h.b16 %v286
      %v870 = vunpack.c.l.b16 %v287
      %v871 = vunpack.c.h.b16 %v287
      %v872 = vunpack.c.l.b16 %v288
      %v873 = vunpack.c.h.b16 %v288
      %v874 = vunpack.c.l.b16 %v289
      %v875 = vunpack.c.h.b16 %v289
      %v876 = vunpack.c.l.b16 %v290
      %v877 = vunpack.c.h.b16 %v290
      %v878 = vunpack.c.l.b16 %v291
      %v879 = vunpack.c.h.b16 %v291
      %v880 = vunpack.c.l.b16 %v292
      %v881 = vunpack.c.h.b16 %v292
      %v882 = vunpack.c.l.b16 %v293
      %v883 = vunpack.c.h.b16 %v293
      %v884 = vunpack.c.l.b16 %v294
      %v885 = vunpack.c.h.b16 %v294
      %v886 = vunpack.c.l.b16 %v295
      %v887 = vunpack.c.h.b16 %v295
      %v888 = vunpack.c.l.b16 %v296
      %v889 = vunpack.c.h.b16 %v296
      %v890 = vunpack.c.l.b16 %v297
      %v891 = vunpack.c.h.b16 %v297
      %v892 = vunpack.c.l.b16 %v298
      %v893 = vunpack.c.h.b16 %v298
      %v894 = vunpack.c.l.b16 %v299
      %v895 = vunpack.c.h.b16 %v299
      %v896 = vunpack.c.l.b16 %v300
      %v897 = vunpack.c.h.b16 %v300
      %v898 = vunpack.c.l.b16 %v301
      %v899 = vunpack.c.h.b16 %v301
      %v900 = vunpack.c.l.b16 %v302
      %v901 = vunpack.c.h.b16 %v302
      %v902 = vunpack.c.l.b16 %v303
      %v903 = vunpack.c.h.b16 %v303
      %v904 = vunpack.c.l.b16 %v304
      %v905 = vunpack.c.h.b16 %v304
      %v906 = vunpack.c.l.b16 %v305
      %v907 = vunpack.c.h.b16 %v305
      %v908 = vunpack.c.l.b16 %v306
      %v909 = vunpack.c.h.b16 %v306
      %v910 = vunpack.c.l.b16 %v307
      %v911 = vunpack.c.h.b16 %v307
      %v912 = vunpack.c.l.b16 %v308
      %v913 = vunpack.c.h.b16 %v308
      %v914 = vunpack.c.l.b16 %v309
      %v915 = vunpack.c.h.b16 %v309
      %v916 = vunpack.c.l.b16 %v310
      %v917 = vunpack.c.h.b16 %v310
      %v918 = vunpack.c.l.b16 %v311
      %v919 = vunpack.c.h.b16 %v311
      %v920 = vunpack.c.l.b16 %v312
      %v921 = vunpack.c.h.b16 %v312
      %v922 = vunpack.c.l.b16 %v313
      %v923 = vunpack.c.h.b16 %v313
      %v924 = vunpack.c.l.b16 %v314
      %v925 = vunpack.c.h.b16 %v314
      %v926 = vunpack.c.l.b16 %v315
      %v927 = vunpack.c.h.b16 %v315
      %v928 = vunpack.c.l.b16 %v316
      %v929 = vunpack.c.h.b16 %v316
      %v930 = vunpack.c.l.b16 %v317
      %v931 = vunpack.c.h.b16 %v317
      %v932 = vunpack.c.l.b16 %v318
      %v933 = vunpack.c.h.b16 %v318
      %v934 = vunpack.c.l.b16 %v319
      %v935 = vunpack.c.h.b16 %v319
      %v936 = vunpack.c.l.b16 %v320
      %v937 = vunpack.c.h.b16 %v320
      %v938 = vunpack.c.l.b16 %v321
      %v939 = vunpack.c.h.b16 %v321
      %v940 = vunpack.c.l.b16 %v322
      %v941 = vunpack.c.h.b16 %v322
      %v942 = vunpack.c.l.b16 %v323
      %v943 = vunpack.c.h.b16 %v323
      %v944 = vunpack.c.l.b16 %v324
      %v945 = vunpack.c.h.b16 %v324
      %v946 = vunpack.c.l.b16 %v325
      %v947 = vunpack.c.h.b16 %v325
      %v948 = vunpack.c.l.b16 %v326
      %v949 = vunpack.c.h.b16 %v326
      %v950 = vunpack.c.l.b16 %v327
      %v951 = vunpack.c.h.b16 %v327
      %v952 = vunpack.c.l.b16 %v328
      %v953 = vunpack.c.h.b16 %v328
      %v954 = vunpack.c.l.b16 %v329
      %v955 = vunpack.c.h.b16 %v329
      %v956 = vunpack.c.l.b16 %v330
      %v957 = vunpack.c.h.b16 %v330
      %v958 = vunpack.c.l.b16 %v331
      %v959 = vunpack.c.h.b16 %v331
      %v960 = vunpack.c.l.b16 %v332
      %v961 = vunpack.c.h.b16 %v332
      %v962 = vunpack.c.l.b16 %v333
      %v963 = vunpack.c.h.b16 %v333
      %v964 = vunpack.c.l.b16 %v334
      %v965 = vunpack.c.h.b16 %v334
      %v966 = vunpack.c.l.b16 %v335
      %v967 = vunpack.c.h.b16 %v335
      %v968 = vunpack.c.l.b16 %v336
      %v969 = vunpack.c.h.b16 %v336
      %v970 = vunpack.c.l.b16 %v337
      %v971 = vunpack.c.h.b16 %v337
      %v972 = vunpack.c.l.b16 %v338
      %v973 = vunpack.c.h.b16 %v338
      %v974 = vunpack.c.l.b16 %v339
      %v975 = vunpack.c.h.b16 %v339
      %v976 = vunpack.c.l.b16 %v340
      %v977 = vunpack.c.h.b16 %v340
      %v978 = vunpack.c.l.b16 %v341
      %v979 = vunpack.c.h.b16 %v341
      %v980 = vunpack.c.l.b16 %v342
      %v981 = vunpack.c.h.b16 %v342
      %v982 = vunpack.c.l.b16 %v343
      %v983 = vunpack.c.h.b16 %v343
      %v984 = vunpack.c.l.b16 %v344
      %v985 = vunpack.c.h.b16 %v344
      %v986 = vunpack.c.l.b16 %v345
      %v987 = vunpack.c.h.b16 %v345
      %v988 = vunpack.c.l.b16 %v346
      %v989 = vunpack.c.h.b16 %v346
      %v990 = vunpack.c.l.b16 %v347
      %v991 = vunpack.c.h.b16 %v347
      %v992 = vunpack.c.l.b16 %v348
      %v993 = vunpack.c.h.b16 %v348
      %v994 = vunpack.c.l.b16 %v349
      %v995 = vunpack.c.h.b16 %v349
      %v996 = vunpack.c.l.b16 %v350
      %v997 = vunpack.c.h.b16 %v350
      %v998 = vunpack.c.l.b16 %v351
      %v999 = vunpack.c.h.b16 %v351
      %v1000 = vunpack.c.l.b16 %v352
      %v1001 = vunpack.c.h.b16 %v352
      %v1002 = vunpack.c.l.b16 %v353
      %v1003 = vunpack.c.h.b16 %v353
      %v1004 = vunpack.c.l.b16 %v354
      %v1005 = vunpack.c.h.b16 %v354
      %v1006 = vunpack.c.l.b16 %v355
      %v1007 = vunpack.c.h.b16 %v355
      %v1008 = vunpack.c.l.b16 %v356
      %v1009 = vunpack.c.h.b16 %v356
      %v1010 = vunpack.c.l.b16 %v357
      %v1011 = vunpack.c.h.b16 %v357
      %v1012 = vunpack.c.l.b16 %v358
      %v1013 = vunpack.c.h.b16 %v358
      %v1014 = vunpack.c.l.b16 %v359
      %v1015 = vunpack.c.h.b16 %v359
      %v1016 = vunpack.c.l.b16 %v360
      %v1017 = vunpack.c.h.b16 %v360
      %v1018 = vunpack.c.l.b16 %v361
      %v1019 = vunpack.c.h.b16 %v361
      %v1020 = vunpack.c.l.b16 %v362
      %v1021 = vunpack.c.h.b16 %v362
      %v1022 = vunpack.c.l.b16 %v363
      %v1023 = vunpack.c.h.b16 %v363
      %v1024 = vunpack.c.l.b16 %v364
      %v1025 = vunpack.c.h.b16 %v364
      %v1026 = vunpack.c.l.b16 %v365
      %v1027 = vunpack.c.h.b16 %v365
      %v1028 = vunpack.c.l.b16 %v366
      %v1029 = vunpack.c.h.b16 %v366
      %v1030 = vunpack.c.l.b16 %v367
      %v1031 = vunpack.c.h.b16 %v367
      %v1032 = vunpack.c.l.b16 %v368
      %v1033 = vunpack.c.h.b16 %v368
      %v1034 = vunpack.c.l.b16 %v369
      %v1035 = vunpack.c.h.b16 %v369
      %v1036 = vunpack.c.l.b16 %v370
      %v1037 = vunpack.c.h.b16 %v370
      %v1038 = vunpack.c.l.b16 %v371
      %v1039 = vunpack.c.h.b16 %v371
      %v1040 = vunpack.c.l.b16 %v372
      %v1041 = vunpack.c.h.b16 %v372
      %v1042 = vunpack.c.l.b16 %v373
      %v1043 = vunpack.c.h.b16 %v373
      %v1044 = vunpack.c.l.b16 %v374
      %v1045 = vunpack.c.h.b16 %v374
      %v1046 = vunpack.c.l.b16 %v375
      %v1047 = vunpack.c.h.b16 %v375
      %v1048 = vunpack.c.l.b16 %v376
      %v1049 = vunpack.c.h.b16 %v376
      %v1050 = vunpack.c.l.b16 %v377
      %v1051 = vunpack.c.h.b16 %v377
      %v1052 = vunpack.c.l.b16 %v378
      %v1053 = vunpack.c.h.b16 %v378
      %v1054 = vunpack.c.l.b16 %v379
      %v1055 = vunpack.c.h.b16 %v379
      %v1056 = vunpack.c.l.b16 %v380
      %v1057 = vunpack.c.h.b16 %v380
      %v1058 = vunpack.c.l.b16 %v381
      %v1059 = vunpack.c.h.b16 %v381
      %v1060 = vunpack.c.l.b16 %v382
      %v1061 = vunpack.c.h.b16 %v382
      %v1062 = vunpack.c.l.b16 %v383
      %v1063 = vunpack.c.h.b16 %v383
      %v1064 = vunpack.c.l.b16 %v384
      %v1065 = vunpack.c.h.b16 %v384
      %v1066 = vunpack.c.l.b16 %v385
      %v1067 = vunpack.c.h.b16 %v385
      %v1068 = vunpack.c.l.b16 %v386
      %v1069 = vunpack.c.h.b16 %v386
      %v1070 = vunpack.c.l.b16 %v387
      %v1071 = vunpack.c.h.b16 %v387
      %v1072 = vunpack.c.l.b16 %v388
      %v1073 = vunpack.c.h.b16 %v388
      %v1074 = vunpack.c.l.b16 %v389
      %v1075 = vunpack.c.h.b16 %v389
      %v1076 = vunpack.c.l.b16 %v390
      %v1077 = vunpack.c.h.b16 %v390
      %v1078 = vunpack.c.l.b16 %v391
      %v1079 = vunpack.c.h.b16 %v391
      %v1080 = vunpack.c.l.b16 %v392
      %v1081 = vunpack.c.h.b16 %v392
      %v1082 = vunpack.c.l.b16 %v393
      %v1083 = vunpack.c.h.b16 %v393
      %v1084 = vunpack.c.l.b16 %v394
      %v1085 = vunpack.c.h.b16 %v394
      %v1086 = vunpack.c.l.b16 %v395
      %v1087 = vunpack.c.h.b16 %v395
      %v1088 = vunpack.c.l.b16 %v396
      %v1089 = vunpack.c.h.b16 %v396
      %v1090 = vunpack.c.l.b16 %v397
      %v1091 = vunpack.c.h.b16 %v397
      %v1092 = vunpack.c.l.b16 %v398
      %v1093 = vunpack.c.h.b16 %v398
      %v1094 = vunpack.c.l.b16 %v399
      %v1095 = vunpack.c.h.b16 %v399
      %v1096 = vunpack.c.l.b16 %v400
      %v1097 = vunpack.c.h.b16 %v400
      %v1098 = vunpack.c.l.b16 %v401
      %v1099 = vunpack.c.h.b16 %v401
      %v1100 = vunpack.c.l.b16 %v402
      %v1101 = vunpack.c.h.b16 %v402
      %v1102 = vunpack.c.l.b16 %v403
      %v1103 = vunpack.c.h.b16 %v403
      %v1104 = vunpack.c.l.b16 %v404
      %v1105 = vunpack.c.h.b16 %v404
      %v1106 = vunpack.c.l.b16 %v405
      %v1107 = vunpack.c.h.b16 %v405
      %v1108 = vunpack.c.l.b16 %v406
      %v1109 = vunpack.c.h.b16 %v406
      %v1110 = vunpack.c.l.b16 %v407
      %v1111 = vunpack.c.h.b16 %v407
      %v1112 = vunpack.c.l.b16 %v408
      %v1113 = vunpack.c.h.b16 %v408
      %v1114 = vunpack.c.l.b16 %v409
      %v1115 = vunpack.c.h.b16 %v409
      %v1116 = vunpack.c.l.b16 %v410
      %v1117 = vunpack.c.h.b16 %v410
      %v1118 = vunpack.c.l.b16 %v411
      %v1119 = vunpack.c.h.b16 %v411
      %v1120 = vunpack.c.l.b16 %v412
      %v1121 = vunpack.c.h.b16 %v412
      %v1122 = vunpack.c.l.b16 %v413
      %v1123 = vunpack.c.h.b16 %v413
      %v1124 = vunpack.c.l.b16 %v414
      %v1125 = vunpack.c.h.b16 %v414
      %v1126 = vunpack.c.l.b16 %v415
      %v1127 = vunpack.c.h.b16 %v415
      %v1128 = vunpack.c.l.b16 %v416
      %v1129 = vunpack.c.h.b16 %v416
      %v1130 = vunpack.c.l.b16 %v417
      %v1131 = vunpack.c.h.b16 %v417
      %v1132 = vunpack.c.l.b16 %v418
      %v1133 = vunpack.c.h.b16 %v418
      %v1134 = vunpack.c.l.b16 %v419
      %v1135 = vunpack.c.h.b16 %v419
      %v1136 = vunpack.c.l.b16 %v420
      %v1137 = vunpack.c.h.b16 %v420
      %v1138 = vunpack.c.l.b16 %v421
      %v1139 = vunpack.c.h.b16 %v421
      %v1140 = vunpack.c.l.b16 %v422
      %v1141 = vunpack.c.h.b16 %v422
      %v1142 = vunpack.c.l.b16 %v423
      %v1143 = vunpack.c.h.b16 %v423
      %v1144 = vunpack.c.l.b16 %v424
      %v1145 = vunpack.c.h.b16 %v424
      %v1146 = vunpack.c.l.b16 %v425
      %v1147 = vunpack.c.h.b16 %v425
      %v1148 = vunpack.c.l.b16 %v426
      %v1149 = vunpack.c.h.b16 %v426
      %v1150 = vunpack.c.l.b16 %v427
      %v1151 = vunpack.c.h.b16 %v427
      %v1152 = vunpack.c.l.b16 %v428
      %v1153 = vunpack.c.h.b16 %v428
      %v1154 = vunpack.c.l.b16 %v429
      %v1155 = vunpack.c.h.b16 %v429
      %v1156 = vunpack.c.l.b16 %v430
      %v1157 = vunpack.c.h.b16 %v430
      %v1158 = vunpack.c.l.b16 %v431
      %v1159 = vunpack.c.h.b16 %v431
      %v1160 = vunpack.c.l.b16 %v432
      %v1161 = vunpack.c.h.b16 %v432
      %v1162 = vunpack.c.l.b16 %v433
      %v1163 = vunpack.c.h.b16 %v433
      %v1164 = vunpack.c.l.b16 %v434
      %v1165 = vunpack.c.h.b16 %v434
      %v1166 = vunpack.c.l.b16 %v435
      %v1167 = vunpack.c.h.b16 %v435
      %v1168 = vunpack.c.l.b16 %v436
      %v1169 = vunpack.c.h.b16 %v436
      %v1170 = vunpack.c.l.b16 %v437
      %v1171 = vunpack.c.h.b16 %v437
      %v1172 = vunpack.c.l.b16 %v438
      %v1173 = vunpack.c.h.b16 %v438
      %v1174 = vunpack.c.l.b16 %v439
      %v1175 = vunpack.c.h.b16 %v439
      %v1176 = vunpack.c.l.b16 %v440
      %v1177 = vunpack.c.h.b16 %v440
      %v1178 = vunpack.c.l.b16 %v441
      %v1179 = vunpack.c.h.b16 %v441
      %v1180 = vunpack.c.l.b16 %v442
      %v1181 = vunpack.c.h.b16 %v442
      %v1182 = vunpack.c.l.b16 %v443
      %v1183 = vunpack.c.h.b16 %v443
      %v1184 = vunpack.c.l.b16 %v444
      %v1185 = vunpack.c.h.b16 %v444
      %v1186 = vunpack.c.l.b16 %v445
      %v1187 = vunpack.c.h.b16 %v445
      %v1188 = vunpack.c.l.b16 %v446
      %v1189 = vunpack.c.h.b16 %v446
      %v1190 = vunpack.c.l.b16 %v447
      %v1191 = vunpack.c.h.b16 %v447
      %v1192 = vunpack.c.l.b16 %v448
      %v1193 = vunpack.c.h.b16 %v448
      %v1194 = vunpack.c.l.b16 %v449
      %v1195 = vunpack.c.h.b16 %v449
      %v1196 = vunpack.c.l.b16 %v450
      %v1197 = vunpack.c.h.b16 %v450
      %v1198 = vunpack.c.l.b16 %v451
      %v1199 = vunpack.c.h.b16 %v451
      %v1200 = vunpack.c.l.b16 %v452
      %v1201 = vunpack.c.h.b16 %v452
      %v1202 = vunpack.c.l.b16 %v453
      %v1203 = vunpack.c.h.b16 %v453
      %v1204 = vunpack.c.l.b16 %v454
      %v1205 = vunpack.c.h.b16 %v454
      %v1206 = vunpack.c.l.b16 %v455
      %v1207 = vunpack.c.h.b16 %v455
      %v1208 = vunpack.c.l.b16 %v456
      %v1209 = vunpack.c.h.b16 %v456
      %v1210 = vunpack.c.l.b16 %v457
      %v1211 = vunpack.c.h.b16 %v457
      %v1212 = vunpack.c.l.b16 %v458
      %v1213 = vunpack.c.h.b16 %v458
      %v1214 = vunpack.c.l.b16 %v459
      %v1215 = vunpack.c.h.b16 %v459
      %v1216 = vunpack.c.l.b16 %v460
      %v1217 = vunpack.c.h.b16 %v460
      %v1218 = vunpack.c.l.b16 %v461
      %v1219 = vunpack.c.h.b16 %v461
      %v1220 = vunpack.c.l.b16 %v462
      %v1221 = vunpack.c.h.b16 %v462
      %v1222 = vunpack.c.l.b16 %v463
      %v1223 = vunpack.c.h.b16 %v463
      %v1224 = vunpack.c.l.b16 %v464
      %v1225 = vunpack.c.h.b16 %v464
      %v1226 = vunpack.c.l.b16 %v465
      %v1227 = vunpack.c.h.b16 %v465
      %v1228 = vunpack.c.l.b16 %v466
      %v1229 = vunpack.c.h.b16 %v466
      %v1230 = vunpack.c.l.b16 %v467
      %v1231 = vunpack.c.h.b16 %v467
      %v1232 = vunpack.c.l.b16 %v468
      %v1233 = vunpack.c.h.b16 %v468
      %v1234 = vunpack.c.l.b16 %v469
      %v1235 = vunpack.c.h.b16 %v469
      %v1236 = vunpack.c.l.b16 %v470
      %v1237 = vunpack.c.h.b16 %v470
      %v1238 = vunpack.c.l.b16 %v471
      %v1239 = vunpack.c.h.b16 %v471
      %v1240 = vunpack.c.l.b16 %v472
      %v1241 = vunpack.c.h.b16 %v472
      %v1242 = vunpack.c.l.b16 %v473
      %v1243 = vunpack.c.h.b16 %v473
      %v1244 = vunpack.c.l.b16 %v474
      %v1245 = vunpack.c.h.b16 %v474
      %v1246 = vunpack.c.l.b16 %v475
      %v1247 = vunpack.c.h.b16 %v475
      %v1248 = vunpack.c.l.b16 %v476
      %v1249 = vunpack.c.h.b16 %v476
      %v1250 = vunpack.c.l.b16 %v477
      %v1251 = vunpack.c.h.b16 %v477
      %v1252 = vunpack.c.l.b16 %v478
      %v1253 = vunpack.c.h.b16 %v478
      %v1254 = vunpack.c.l.b16 %v479
      %v1255 = vunpack.c.h.b16 %v479
      %v1256 = vunpack.c.l.b16 %v480
      %v1257 = vunpack.c.h.b16 %v480
      %v1258 = vunpack.c.l.b16 %v481
      %v1259 = vunpack.c.h.b16 %v481
      %v1260 = vpack.c.b16 %v752, %v748
      %v1261 = vpack.c.b16 %v753, %v749
      %v1262 = vpack.c.b16 %v754, %v750
      %v1263 = vpack.c.b16 %v755, %v751
      %v1264 = vpack.c.b16 %v760, %v756
      %v1265 = vpack.c.b16 %v761, %v757
      %v1266 = vpack.c.b16 %v762, %v758
      %v1267 = vpack.c.b16 %v763, %v759
      %v1268 = vpack.c.b16 %v768, %v764
      %v1269 = vpack.c.b16 %v769, %v765
      %v1270 = vpack.c.b16 %v770, %v766
      %v1271 = vpack.c.b16 %v771, %v767
      %v1272 = vpack.c.b16 %v776, %v772
      %v1273 = vpack.c.b16 %v777, %v773
      %v1274 = vpack.c.b16 %v778, %v774
      %v1275 = vpack.c.b16 %v779, %v775
      %v1276 = vpack.c.b16 %v784, %v780
      %v1277 = vpack.c.b16 %v785, %v781
      %v1278 = vpack.c.b16 %v786, %v782
      %v1279 = vpack.c.b16 %v787, %v783
      %v1280 = vpack.c.b16 %v792, %v788
      %v1281 = vpack.c.b16 %v793, %v789
      %v1282 = vpack.c.b16 %v794, %v790
      %v1283 = vpack.c.b16 %v795, %v791
      %v1284 = vpack.c.b16 %v800, %v796
      %v1285 = vpack.c.b16 %v801, %v797
      %v1286 = vpack.c.b16 %v802, %v798
      %v1287 = vpack.c.b16 %v803, %v799
      %v1288 = vpack.c.b16 %v808, %v804
      %v1289 = vpack.c.b16 %v809, %v805
      %v1290 = vpack.c.b16 %v810, %v806
      %v1291 = vpack.c.b16 %v811, %v807
      %v1292 = vpack.c.b16 %v816, %v812
      %v1293 = vpack.c.b16 %v817, %v813
      %v1294 = vpack.c.b16 %v818, %v814
      %v1295 = vpack.c.b16 %v819, %v815
      %v1296 = vpack.c.b16 %v824, %v820
      %v1297 = vpack.c.b16 %v825, %v821
      %v1298 = vpack.c.b16 %v826, %v822
      %v1299 = vpack.c.b16 %v827, %v823
      %v1300 = vpack.c.b16 %v832, %v828
      %v1301 = vpack.c.b16 %v833, %v829
      %v1302 = vpack.c.b16 %v834, %v830
      %v1303 = vpack.c.b16 %v835, %v831
      %v1304 = vpack.c.b16 %v840, %v836
      %v1305 = vpack.c.b16 %v841, %v837
      %v1306 = vpack.c.b16 %v842, %v838
      %v1307 = vpack.c.b16 %v843, %v839
      %v1308 = vpack.c.b16 %v848, %v844
      %v1309 = vpack.c.b16 %v849, %v845
      %v1310 = vpack.c.b16 %v850, %v846
      %v1311 = vpack.c.b16 %v851, %v847
      %v1312 = vpack.c.b16 %v856, %v852
      %v1313 = vpack.c.b16 %v857, %v853
      %v1314 = vpack.c.b16 %v858, %v854
      %v1315 = vpack.c.b16 %v859, %v855
      %v1316 = vpack.c.b16 %v864, %v860
      %v1317 = vpack.c.b16 %v865, %v861
      %v1318 = vpack.c.b16 %v866, %v862
      %v1319 = vpack.c.b16 %v867, %v863
      %v1320 = vpack.c.b16 %v872, %v868
      %v1321 = vpack.c.b16 %v873, %v869
      %v1322 = vpack.c.b16 %v874, %v870
      %v1323 = vpack.c.b16 %v875, %v871
      %v1324 = vpack.c.b16 %v880, %v876
      %v1325 = vpack.c.b16 %v881, %v877
      %v1326 = vpack.c.b16 %v882, %v878
      %v1327 = vpack.c.b16 %v883, %v879
      %v1328 = vpack.c.b16 %v888, %v884
      %v1329 = vpack.c.b16 %v889, %v885
      %v1330 = vpack.c.b16 %v890, %v886
      %v1331 = vpack.c.b16 %v891, %v887
      %v1332 = vpack.c.b16 %v896, %v892
      %v1333 = vpack.c.b16 %v897, %v893
      %v1334 = vpack.c.b16 %v898, %v894
      %v1335 = vpack.c.b16 %v899, %v895
      %v1336 = vpack.c.b16 %v904, %v900
      %v1337 = vpack.c.b16 %v905, %v901
      %v1338 = vpack.c.b16 %v906, %v902
      %v1339 = vpack.c.b16 %v907, %v903
      %v1340 = vpack.c.b16 %v912, %v908
      %v1341 = vpack.c.b16 %v913, %v909
      %v1342 = vpack.c.b16 %v914, %v910
      %v1343 = vpack.c.b16 %v915, %v911
      %v1344 = vpack.c.b16 %v920, %v916
      %v1345 = vpack.c.b16 %v921, %v917
      %v1346 = vpack.c.b16 %v922, %v918
      %v1347 = vpack.c.b16 %v923, %v919
      %v1348 = vpack.c.b16 %v928, %v924
      %v1349 = vpack.c.b16 %v929, %v925
      %v1350 = vpack.c.b16 %v930, %v926
      %v1351 = vpack.c.b16 %v931, %v927
      %v1352 = vpack.c.b16 %v936, %v932
      %v1353 = vpack.c.b16 %v937, %v933
      %v1354 = vpack.c.b16 %v938, %v934
      %v1355 = vpack.c.b16 %v939, %v935
      %v1356 = vpack.c.b16 %v944, %v940
      %v1357 = vpack.c.b16 %v945, %v941
      %v1358 = vpack.c.b16 %v946, %v942
      %v1359 = vpack.c.b16 %v947, %v943
      %v1360 = vpack.c.b16 %v952, %v948
      %v1361 = vpack.c.b16 %v953, %v949
      %v1362 = vpack.c.b16 %v954, %v950
      %v1363 = vpack.c.b16 %v955, %v951
      %v1364 = vpack.c.b16 %v960, %v956
      %v1365 = vpack.c.b16 %v961, %v957
      %v1366 = vpack.c.b16 %v962, %v958
      %v1367 = vpack.c.b16 %v963, %v959
      %v1368 = vpack.c.b16 %v968, %v964
      %v1369 = vpack.c.b16 %v969, %v965
      %v1370 = vpack.c.b16 %v970, %v966
      %v1371 = vpack.c.b16 %v971, %v967
      %v1372 = vpack.c.b16 %v976, %v972
      %v1373 = vpack.c.b16 %v977, %v973
      %v1374 = vpack.c.b16 %v978, %v974
      %v1375 = vpack.c.b16 %v979, %v975
      %v1376 = vpack.c.b16 %v984, %v980
      %v1377 = vpack.c.b16 %v985, %v981
      %v1378 = vpack.c.b16 %v986, %v982
      %v1379 = vpack.c.b16 %v987, %v983
      %v1380 = vpack.c.b16 %v992, %v988
      %v1381 = vpack.c.b16 %v993, %v989
      %v1382 = vpack.c.b16 %v994, %v990
      %v1383 = vpack.c.b16 %v995, %v991
      %v1384 = vpack.c.b16 %v1000, %v996
      %v1385 = vpack.c.b16 %v1001, %v997
      %v1386 = vpack.c.b16 %v1002, %v998
      %v1387 = vpack.c.b16 %v1003, %v999
      %v1388 = vpack.c.b16 %v1008, %v1004
      %v1389 = vpack.c.b16 %v1009, %v1005
      %v1390 = vpack.c.b16 %v1010, %v1006
      %v1391 = vpack.c.b16 %v1011, %v1007
      %v1392 = vpack.c.b16 %v1016, %v1012
      %v1393 = vpack.c.b16 %v1017, %v1013
      %v1394 = vpack.c.b16 %v1018, %v1014
      %v1395 = vpack.c.b16 %v1019, %v1015
      %v1396 = vpack.c.b16 %v1024, %v1020
      %v1397 = vpack.c.b16 %v1025, %v1021
      %v1398 = vpack.c.b16 %v1026, %v1022
      %v1399 = vpack.c.b16 %v1027, %v1023
      %v1400 = vpack.c.b16 %v1032, %v1028
      %v1401 = vpack.c.b16 %v1033, %v1029
      %v1402 = vpack.c.b16 %v1034, %v1030
      %v1403 = vpack.c.b16 %v1035, %v1031
      %v1404 = vpack.c.b16 %v1040, %v1036
      %v1405 = vpack.c.b16 %v1041, %v1037
      %v1406 = vpack.c.b16 %v1042, %v1038
      %v1407 = vpack.c.b16 %v1043, %v1039
      %v1408 = vpack.c.b16 %v1048, %v1044
      %v1409 = vpack.c.b16 %v1049, %v1045
      %v1410 = vpack.c.b16 %v1050, %v1046
      %v1411 = vpack.c.b16 %v1051, %v1047
      %v1412 = vpack.c.b16 %v1056, %v1052
      %v1413 = vpack.c.b16 %v1057, %v1053
      %v1414 = vpack.c.b16 %v1058, %v1054
      %v1415 = vpack.c.b16 %v1059, %v1055
      %v1416 = vpack.c.b16 %v1064, %v1060
      %v1417 = vpack.c.b16 %v1065, %v1061
      %v1418 = vpack.c.b16 %v1066, %v1062
      %v1419 = vpack.c.b16 %v1067, %v1063
      %v1420 = vpack.c.b16 %v1072, %v1068
      %v1421 = vpack.c.b16 %v1073, %v1069
      %v1422 = vpack.c.b16 %v1074, %v1070
      %v1423 = vpack.c.b16 %v1075, %v1071
      %v1424 = vpack.c.b16 %v1080, %v1076
      %v1425 = vpack.c.b16 %v1081, %v1077
      %v1426 = vpack.c.b16 %v1082, %v1078
      %v1427 = vpack.c.b16 %v1083, %v1079
      %v1428 = vpack.c.b16 %v1088, %v1084
      %v1429 = vpack.c.b16 %v1089, %v1085
      %v1430 = vpack.c.b16 %v1090, %v1086
      %v1431 = vpack.c.b16 %v1091, %v1087
      %v1432 = vpack.c.b16 %v1096, %v1092
      %v1433 = vpack.c.b16 %v1097, %v1093
      %v1434 = vpack.c.b16 %v1098, %v1094
      %v1435 = vpack.c.b16 %v1099, %v1095
      %v1436 = vpack.c.b16 %v1104, %v1100
      %v1437 = vpack.c.b16 %v1105, %v1101
      %v1438 = vpack.c.b16 %v1106, %v1102
      %v1439 = vpack.c.b16 %v1107, %v1103
      %v1440 = vpack.c.b16 %v1112, %v1108
      %v1441 = vpack.c.b16 %v1113, %v1109
      %v1442 = vpack.c.b16 %v1114, %v1110
      %v1443 = vpack.c.b16 %v1115, %v1111
      %v1444 = vpack.c.b16 %v1120, %v1116
      %v1445 = vpack.c.b16 %v1121, %v1117
      %v1446 = vpack.c.b16 %v1122, %v1118
      %v1447 = vpack.c.b16 %v1123, %v1119
      %v1448 = vpack.c.b16 %v1128, %v1124
      %v1449 = vpack.c.b16 %v1129, %v1125
      %v1450 = vpack.c.b16 %v1130, %v1126
      %v1451 = vpack.c.b16 %v1131, %v1127
      %v1452 = vpack.c.b16 %v1136, %v1132
      %v1453 = vpack.c.b16 %v1137, %v1133
      %v1454 = vpack.c.b16 %v1138, %v1134
      %v1455 = vpack.c.b16 %v1139, %v1135
      %v1456 = vpack.c.b16 %v1144, %v1140
      %v1457 = vpack.c.b16 %v1145, %v1141
      %v1458 = vpack.c.b16 %v1146, %v1142
      %v1459 = vpack.c.b16 %v1147, %v1143
      %v1460 = vpack.c.b16 %v1152, %v1148
      %v1461 = vpack.c.b16 %v1153, %v1149
      %v1462 = vpack.c.b16 %v1154, %v1150
      %v1463 = vpack.c.b16 %v1155, %v1151
      %v1464 = vpack.c.b16 %v1160, %v1156
      %v1465 = vpack.c.b16 %v1161, %v1157
      %v1466 = vpack.c.b16 %v1162, %v1158
      %v1467 = vpack.c.b16 %v1163, %v1159
      %v1468 = vpack.c.b16 %v1168, %v1164
      %v1469 = vpack.c.b16 %v1169, %v1165
      %v1470 = vpack.c.b16 %v1170, %v1166
      %v1471 = vpack.c.b16 %v1171, %v1167
      %v1472 = vpack.c.b16 %v1176, %v1172
      %v1473 = vpack.c.b16 %v1177, %v1173
      %v1474 = vpack.c.b16 %v1178, %v1174
      %v1475 = vpack.c.b16 %v1179, %v1175
      %v1476 = vpack.c.b16 %v1184, %v1180
      %v1477 = vpack.c.b16 %v1185, %v1181
      %v1478 = vpack.c.b16 %v1186, %v1182
      %v1479 = vpack.c.b16 %v1187, %v1183
      %v1480 = vpack.c.b16 %v1192, %v1188
      %v1481 = vpack.c.b16 %v1193, %v1189
      %v1482 = vpack.c.b16 %v1194, %v1190
      %v1483 = vpack.c.b16 %v1195, %v1191
      %v1484 = vpack.c.b16 %v1200, %v1196
      %v1485 = vpack.c.b16 %v1201, %v1197
      %v1486 = vpack.c.b16 %v1202, %v1198
      %v1487 = vpack.c.b16 %v1203, %v1199
      %v1488 = vpack.c.b16 %v1208, %v1204
      %v1489 = vpack.c.b16 %v1209, %v1205
      %v1490 = vpack.c.b16 %v1210, %v1206
      %v1491 = vpack.c.b16 %v1211, %v1207
      %v1492 = vpack.c.b16 %v1216, %v1212
      %v1493 = vpack.c.b16 %v1217, %v1213
      %v1494 = vpack.c.b16 %v1218, %v1214
      %v1495 = vpack.c.b16 %v1219, %v1215
      %v1496 = vpack.c.b16 %v1224, %v1220
      %v1497 = vpack.c.b16 %v1225, %v1221
      %v1498 = vpack.c.b16 %v1226, %v1222
      %v1499 = vpack.c.b16 %v1227, %v1223
      %v1500 = vpack.c.b16 %v1232, %v1228
      %v1501 = vpack.c.b16 %v1233, %v1229
      %v1502 = vpack.c.b16 %v1234, %v1230
      %v1503 = vpack.c.b16 %v1235, %v1231
      %v1504 = vpack.c.b16 %v1240, %v1236
      %v1505 = vpack.c.b16 %v1241, %v1237
      %v1506 = vpack.c.b16 %v1242, %v1238
      %v1507 = vpack.c.b16 %v1243, %v1239
      %v1508 = vpack.c.b16 %v1248, %v1244
      %v1509 = vpack.c.b16 %v1249, %v1245
      %v1510 = vpack.c.b16 %v1250, %v1246
      %v1511 = vpack.c.b16 %v1251, %v1247
      %v1512 = vpack.c.b16 %v1256, %v1252
      %v1513 = vpack.c.b16 %v1257, %v1253
      %v1514 = vpack.c.b16 %v1258, %v1254
      %v1515 = vpack.c.b16 %v1259, %v1255
      %1772 = vmatpush.bf16.msra.mxu0 %v1288
      %1773 = vmatpush.bf16.msra.mxu0 %v1284
      %1774 = vmatpush.bf16.msra.mxu0 %v1280
      %1775 = vmatpush.bf16.msra.mxu0 %v1276
      %1776 = vmatpush.bf16.msra.mxu0 %v1272
      %1777 = vmatpush.bf16.msra.mxu0 %v1268
      %1778 = vmatpush.bf16.msra.mxu0 %v1264
      %1779 = vmatpush.bf16.msra.mxu0 %v1260
      %1780 = vmatmul.bf16.gmra.mxu0 %v218
      %v1781 = vpop.f32.mrf.mxu0
      %v1782 = vadd.f32 %v484, %v1781
      %v1783 = vpop.f32.mrf.mxu0
      %1784 = vdwg.mxu0
      %1785 = vmatpush.bf16.msra.mxu0 %v1320
      %1786 = vmatpush.bf16.msra.mxu0 %v1316
      %1787 = vmatpush.bf16.msra.mxu0 %v1312
      %1788 = vmatpush.bf16.msra.mxu0 %v1308
      %1789 = vmatpush.bf16.msra.mxu0 %v1304
      %1790 = vmatpush.bf16.msra.mxu0 %v1300
      %1791 = vmatpush.bf16.msra.mxu0 %v1296
      %1792 = vmatpush.bf16.msra.mxu0 %v1292
      %1793 = vmatmul.bf16.gmra.mxu0 %v219
      %v1794 = vpop.f32.mrf.mxu0
      %v1795 = vadd.f32 %v1782, %v1794
      %v1796 = vpop.f32.mrf.mxu0
      %1797 = vdwg.mxu0
      %1798 = vmatpush.bf16.msra.mxu0 %v1352
      %1799 = vmatpush.bf16.msra.mxu0 %v1348
      %1800 = vmatpush.bf16.msra.mxu0 %v1344
      %1801 = vmatpush.bf16.msra.mxu0 %v1340
      %1802 = vmatpush.bf16.msra.mxu0 %v1336
      %1803 = vmatpush.bf16.msra.mxu0 %v1332
      %1804 = vmatpush.bf16.msra.mxu0 %v1328
      %1805 = vmatpush.bf16.msra.mxu0 %v1324
      %1806 = vmatmul.bf16.gmra.mxu0 %v220
      %v1807 = vpop.f32.mrf.mxu0
      %v1808 = vadd.f32 %v1795, %v1807
      %v1809 = vpop.f32.mrf.mxu0
      %1810 = vdwg.mxu0
      %1811 = vmatpush.bf16.msra.mxu0 %v1384
      %1812 = vmatpush.bf16.msra.mxu0 %v1380
      %1813 = vmatpush.bf16.msra.mxu0 %v1376
      %1814 = vmatpush.bf16.msra.mxu0 %v1372
      %1815 = vmatpush.bf16.msra.mxu0 %v1368
      %1816 = vmatpush.bf16.msra.mxu0 %v1364
      %1817 = vmatpush.bf16.msra.mxu0 %v1360
      %1818 = vmatpush.bf16.msra.mxu0 %v1356
      %1819 = vmatmul.bf16.gmra.mxu0 %v221
      %v1820 = vpop.f32.mrf.mxu0
      %v1821 = vadd.f32 %v1808, %v1820
      %v1822 = vpop.f32.mrf.mxu0
      %1823 = vdwg.mxu0
      %1824 = vmatpush.bf16.msra.mxu0 %v1416
      %1825 = vmatpush.bf16.msra.mxu0 %v1412
      %1826 = vmatpush.bf16.msra.mxu0 %v1408
      %1827 = vmatpush.bf16.msra.mxu0 %v1404
      %1828 = vmatpush.bf16.msra.mxu0 %v1400
      %1829 = vmatpush.bf16.msra.mxu0 %v1396
      %1830 = vmatpush.bf16.msra.mxu0 %v1392
      %1831 = vmatpush.bf16.msra.mxu0 %v1388
      %1832 = vmatmul.bf16.gmra.mxu0 %v222
      %v1833 = vpop.f32.mrf.mxu0
      %v1834 = vadd.f32 %v1821, %v1833
      %v1835 = vpop.f32.mrf.mxu0
      %1836 = vdwg.mxu0
      %1837 = vmatpush.bf16.msra.mxu0 %v1448
      %1838 = vmatpush.bf16.msra.mxu0 %v1444
      %1839 = vmatpush.bf16.msra.mxu0 %v1440
      %1840 = vmatpush.bf16.msra.mxu0 %v1436
      %1841 = vmatpush.bf16.msra.mxu0 %v1432
      %1842 = vmatpush.bf16.msra.mxu0 %v1428
      %1843 = vmatpush.bf16.msra.mxu0 %v1424
      %1844 = vmatpush.bf16.msra.mxu0 %v1420
      %1845 = vmatmul.bf16.gmra.mxu0 %v223
      %v1846 = vpop.f32.mrf.mxu0
      %v1847 = vadd.f32 %v1834, %v1846
      %v1848 = vpop.f32.mrf.mxu0
      %1849 = vdwg.mxu0
      %1850 = vmatpush.bf16.msra.mxu0 %v1480
      %1851 = vmatpush.bf16.msra.mxu0 %v1476
      %1852 = vmatpush.bf16.msra.mxu0 %v1472
      %1853 = vmatpush.bf16.msra.mxu0 %v1468
      %1854 = vmatpush.bf16.msra.mxu0 %v1464
      %1855 = vmatpush.bf16.msra.mxu0 %v1460
      %1856 = vmatpush.bf16.msra.mxu0 %v1456
      %1857 = vmatpush.bf16.msra.mxu0 %v1452
      %1858 = vmatmul.bf16.gmra.mxu0 %v224
      %v1859 = vpop.f32.mrf.mxu0
      %v1860 = vadd.f32 %v1847, %v1859
      %v1861 = vpop.f32.mrf.mxu0
      %1862 = vdwg.mxu0
      %1863 = vmatpush.bf16.msra.mxu0 %v1512
      %1864 = vmatpush.bf16.msra.mxu0 %v1508
      %1865 = vmatpush.bf16.msra.mxu0 %v1504
      %1866 = vmatpush.bf16.msra.mxu0 %v1500
      %1867 = vmatpush.bf16.msra.mxu0 %v1496
      %1868 = vmatpush.bf16.msra.mxu0 %v1492
      %1869 = vmatpush.bf16.msra.mxu0 %v1488
      %1870 = vmatpush.bf16.msra.mxu0 %v1484
      %1871 = vmatmul.bf16.gmra.mxu0 %v225
      %v1872 = vpop.f32.mrf.mxu0
      %v1873 = vadd.f32 %v1860, %v1872
      %v1874 = vpop.f32.mrf.mxu0
      %1875 = vdwg.mxu0
      %1876 = vmatpush.bf16.msra.mxu0 %v1289
      %1877 = vmatpush.bf16.msra.mxu0 %v1285
      %1878 = vmatpush.bf16.msra.mxu0 %v1281
      %1879 = vmatpush.bf16.msra.mxu0 %v1277
      %1880 = vmatpush.bf16.msra.mxu0 %v1273
      %1881 = vmatpush.bf16.msra.mxu0 %v1269
      %1882 = vmatpush.bf16.msra.mxu0 %v1265
      %1883 = vmatpush.bf16.msra.mxu0 %v1261
      %1884 = vmatmul.bf16.gmra.mxu0 %v218
      %v1885 = vpop.f32.mrf.mxu0
      %v1886 = vadd.f32 %v485, %v1885
      %v1887 = vpop.f32.mrf.mxu0
      %1888 = vdwg.mxu0
      %1889 = vmatpush.bf16.msra.mxu0 %v1321
      %1890 = vmatpush.bf16.msra.mxu0 %v1317
      %1891 = vmatpush.bf16.msra.mxu0 %v1313
      %1892 = vmatpush.bf16.msra.mxu0 %v1309
      %1893 = vmatpush.bf16.msra.mxu0 %v1305
      %1894 = vmatpush.bf16.msra.mxu0 %v1301
      %1895 = vmatpush.bf16.msra.mxu0 %v1297
      %1896 = vmatpush.bf16.msra.mxu0 %v1293
      %1897 = vmatmul.bf16.gmra.mxu0 %v219
      %v1898 = vpop.f32.mrf.mxu0
      %v1899 = vadd.f32 %v1886, %v1898
      %v1900 = vpop.f32.mrf.mxu0
      %1901 = vdwg.mxu0
      %1902 = vmatpush.bf16.msra.mxu0 %v1353
      %1903 = vmatpush.bf16.msra.mxu0 %v1349
      %1904 = vmatpush.bf16.msra.mxu0 %v1345
      %1905 = vmatpush.bf16.msra.mxu0 %v1341
      %1906 = vmatpush.bf16.msra.mxu0 %v1337
      %1907 = vmatpush.bf16.msra.mxu0 %v1333
      %1908 = vmatpush.bf16.msra.mxu0 %v1329
      %1909 = vmatpush.bf16.msra.mxu0 %v1325
      %1910 = vmatmul.bf16.gmra.mxu0 %v220
      %v1911 = vpop.f32.mrf.mxu0
      %v1912 = vadd.f32 %v1899, %v1911
      %v1913 = vpop.f32.mrf.mxu0
      %1914 = vdwg.mxu0
      %1915 = vmatpush.bf16.msra.mxu0 %v1385
      %1916 = vmatpush.bf16.msra.mxu0 %v1381
      %1917 = vmatpush.bf16.msra.mxu0 %v1377
      %1918 = vmatpush.bf16.msra.mxu0 %v1373
      %1919 = vmatpush.bf16.msra.mxu0 %v1369
      %1920 = vmatpush.bf16.msra.mxu0 %v1365
      %1921 = vmatpush.bf16.msra.mxu0 %v1361
      %1922 = vmatpush.bf16.msra.mxu0 %v1357
      %1923 = vmatmul.bf16.gmra.mxu0 %v221
      %v1924 = vpop.f32.mrf.mxu0
      %v1925 = vadd.f32 %v1912, %v1924
      %v1926 = vpop.f32.mrf.mxu0
      %1927 = vdwg.mxu0
      %1928 = vmatpush.bf16.msra.mxu0 %v1417
      %1929 = vmatpush.bf16.msra.mxu0 %v1413
      %1930 = vmatpush.bf16.msra.mxu0 %v1409
      %1931 = vmatpush.bf16.msra.mxu0 %v1405
      %1932 = vmatpush.bf16.msra.mxu0 %v1401
      %1933 = vmatpush.bf16.msra.mxu0 %v1397
      %1934 = vmatpush.bf16.msra.mxu0 %v1393
      %1935 = vmatpush.bf16.msra.mxu0 %v1389
      %1936 = vmatmul.bf16.gmra.mxu0 %v222
      %v1937 = vpop.f32.mrf.mxu0
      %v1938 = vadd.f32 %v1925, %v1937
      %v1939 = vpop.f32.mrf.mxu0
      %1940 = vdwg.mxu0
      %1941 = vmatpush.bf16.msra.mxu0 %v1449
      %1942 = vmatpush.bf16.msra.mxu0 %v1445
      %1943 = vmatpush.bf16.msra.mxu0 %v1441
      %1944 = vmatpush.bf16.msra.mxu0 %v1437
      %1945 = vmatpush.bf16.msra.mxu0 %v1433
      %1946 = vmatpush.bf16.msra.mxu0 %v1429
      %1947 = vmatpush.bf16.msra.mxu0 %v1425
      %1948 = vmatpush.bf16.msra.mxu0 %v1421
      %1949 = vmatmul.bf16.gmra.mxu0 %v223
      %v1950 = vpop.f32.mrf.mxu0
      %v1951 = vadd.f32 %v1938, %v1950
      %v1952 = vpop.f32.mrf.mxu0
      %1953 = vdwg.mxu0
      %1954 = vmatpush.bf16.msra.mxu0 %v1481
      %1955 = vmatpush.bf16.msra.mxu0 %v1477
      %1956 = vmatpush.bf16.msra.mxu0 %v1473
      %1957 = vmatpush.bf16.msra.mxu0 %v1469
      %1958 = vmatpush.bf16.msra.mxu0 %v1465
      %1959 = vmatpush.bf16.msra.mxu0 %v1461
      %1960 = vmatpush.bf16.msra.mxu0 %v1457
      %1961 = vmatpush.bf16.msra.mxu0 %v1453
      %1962 = vmatmul.bf16.gmra.mxu0 %v224
      %v1963 = vpop.f32.mrf.mxu0
      %v1964 = vadd.f32 %v1951, %v1963
      %v1965 = vpop.f32.mrf.mxu0
      %1966 = vdwg.mxu0
      %1967 = vmatpush.bf16.msra.mxu0 %v1513
      %1968 = vmatpush.bf16.msra.mxu0 %v1509
      %1969 = vmatpush.bf16.msra.mxu0 %v1505
      %1970 = vmatpush.bf16.msra.mxu0 %v1501
      %1971 = vmatpush.bf16.msra.mxu0 %v1497
      %1972 = vmatpush.bf16.msra.mxu0 %v1493
      %1973 = vmatpush.bf16.msra.mxu0 %v1489
      %1974 = vmatpush.bf16.msra.mxu0 %v1485
      %1975 = vmatmul.bf16.gmra.mxu0 %v225
      %v1976 = vpop.f32.mrf.mxu0
      %v1977 = vadd.f32 %v1964, %v1976
      %v1978 = vpop.f32.mrf.mxu0
      %1979 = vdwg.mxu0
      %1980 = vmatpush.bf16.msra.mxu0 %v1290
      %1981 = vmatpush.bf16.msra.mxu0 %v1286
      %1982 = vmatpush.bf16.msra.mxu0 %v1282
      %1983 = vmatpush.bf16.msra.mxu0 %v1278
      %1984 = vmatpush.bf16.msra.mxu0 %v1274
      %1985 = vmatpush.bf16.msra.mxu0 %v1270
      %1986 = vmatpush.bf16.msra.mxu0 %v1266
      %1987 = vmatpush.bf16.msra.mxu0 %v1262
      %1988 = vmatmul.bf16.gmra.mxu0 %v218
      %v1989 = vpop.f32.mrf.mxu0
      %v1990 = vadd.f32 %v486, %v1989
      %v1991 = vpop.f32.mrf.mxu0
      %1992 = vdwg.mxu0
      %1993 = vmatpush.bf16.msra.mxu0 %v1322
      %1994 = vmatpush.bf16.msra.mxu0 %v1318
      %1995 = vmatpush.bf16.msra.mxu0 %v1314
      %1996 = vmatpush.bf16.msra.mxu0 %v1310
      %1997 = vmatpush.bf16.msra.mxu0 %v1306
      %1998 = vmatpush.bf16.msra.mxu0 %v1302
      %1999 = vmatpush.bf16.msra.mxu0 %v1298
      %2000 = vmatpush.bf16.msra.mxu0 %v1294
      %2001 = vmatmul.bf16.gmra.mxu0 %v219
      %v2002 = vpop.f32.mrf.mxu0
      %v2003 = vadd.f32 %v1990, %v2002
      %v2004 = vpop.f32.mrf.mxu0
      %2005 = vdwg.mxu0
      %2006 = vmatpush.bf16.msra.mxu0 %v1354
      %2007 = vmatpush.bf16.msra.mxu0 %v1350
      %2008 = vmatpush.bf16.msra.mxu0 %v1346
      %2009 = vmatpush.bf16.msra.mxu0 %v1342
      %2010 = vmatpush.bf16.msra.mxu0 %v1338
      %2011 = vmatpush.bf16.msra.mxu0 %v1334
      %2012 = vmatpush.bf16.msra.mxu0 %v1330
      %2013 = vmatpush.bf16.msra.mxu0 %v1326
      %2014 = vmatmul.bf16.gmra.mxu0 %v220
      %v2015 = vpop.f32.mrf.mxu0
      %v2016 = vadd.f32 %v2003, %v2015
      %v2017 = vpop.f32.mrf.mxu0
      %2018 = vdwg.mxu0
      %2019 = vmatpush.bf16.msra.mxu0 %v1386
      %2020 = vmatpush.bf16.msra.mxu0 %v1382
      %2021 = vmatpush.bf16.msra.mxu0 %v1378
      %2022 = vmatpush.bf16.msra.mxu0 %v1374
      %2023 = vmatpush.bf16.msra.mxu0 %v1370
      %2024 = vmatpush.bf16.msra.mxu0 %v1366
      %2025 = vmatpush.bf16.msra.mxu0 %v1362
      %2026 = vmatpush.bf16.msra.mxu0 %v1358
      %2027 = vmatmul.bf16.gmra.mxu0 %v221
      %v2028 = vpop.f32.mrf.mxu0
      %v2029 = vadd.f32 %v2016, %v2028
      %v2030 = vpop.f32.mrf.mxu0
      %2031 = vdwg.mxu0
      %2032 = vmatpush.bf16.msra.mxu0 %v1418
      %2033 = vmatpush.bf16.msra.mxu0 %v1414
      %2034 = vmatpush.bf16.msra.mxu0 %v1410
      %2035 = vmatpush.bf16.msra.mxu0 %v1406
      %2036 = vmatpush.bf16.msra.mxu0 %v1402
      %2037 = vmatpush.bf16.msra.mxu0 %v1398
      %2038 = vmatpush.bf16.msra.mxu0 %v1394
      %2039 = vmatpush.bf16.msra.mxu0 %v1390
      %2040 = vmatmul.bf16.gmra.mxu0 %v222
      %v2041 = vpop.f32.mrf.mxu0
      %v2042 = vadd.f32 %v2029, %v2041
      %v2043 = vpop.f32.mrf.mxu0
      %2044 = vdwg.mxu0
      %2045 = vmatpush.bf16.msra.mxu0 %v1450
      %2046 = vmatpush.bf16.msra.mxu0 %v1446
      %2047 = vmatpush.bf16.msra.mxu0 %v1442
      %2048 = vmatpush.bf16.msra.mxu0 %v1438
      %2049 = vmatpush.bf16.msra.mxu0 %v1434
      %2050 = vmatpush.bf16.msra.mxu0 %v1430
      %2051 = vmatpush.bf16.msra.mxu0 %v1426
      %2052 = vmatpush.bf16.msra.mxu0 %v1422
      %2053 = vmatmul.bf16.gmra.mxu0 %v223
      %v2054 = vpop.f32.mrf.mxu0
      %v2055 = vadd.f32 %v2042, %v2054
      %v2056 = vpop.f32.mrf.mxu0
      %2057 = vdwg.mxu0
      %2058 = vmatpush.bf16.msra.mxu0 %v1482
      %2059 = vmatpush.bf16.msra.mxu0 %v1478
      %2060 = vmatpush.bf16.msra.mxu0 %v1474
      %2061 = vmatpush.bf16.msra.mxu0 %v1470
      %2062 = vmatpush.bf16.msra.mxu0 %v1466
      %2063 = vmatpush.bf16.msra.mxu0 %v1462
      %2064 = vmatpush.bf16.msra.mxu0 %v1458
      %2065 = vmatpush.bf16.msra.mxu0 %v1454
      %2066 = vmatmul.bf16.gmra.mxu0 %v224
      %v2067 = vpop.f32.mrf.mxu0
      %v2068 = vadd.f32 %v2055, %v2067
      %v2069 = vpop.f32.mrf.mxu0
      %2070 = vdwg.mxu0
      %2071 = vmatpush.bf16.msra.mxu0 %v1514
      %2072 = vmatpush.bf16.msra.mxu0 %v1510
      %2073 = vmatpush.bf16.msra.mxu0 %v1506
      %2074 = vmatpush.bf16.msra.mxu0 %v1502
      %2075 = vmatpush.bf16.msra.mxu0 %v1498
      %2076 = vmatpush.bf16.msra.mxu0 %v1494
      %2077 = vmatpush.bf16.msra.mxu0 %v1490
      %2078 = vmatpush.bf16.msra.mxu0 %v1486
      %2079 = vmatmul.bf16.gmra.mxu0 %v225
      %v2080 = vpop.f32.mrf.mxu0
      %v2081 = vadd.f32 %v2068, %v2080
      %v2082 = vpop.f32.mrf.mxu0
      %2083 = vdwg.mxu0
      %2084 = vmatpush.bf16.msra.mxu0 %v1291
      %2085 = vmatpush.bf16.msra.mxu0 %v1287
      %2086 = vmatpush.bf16.msra.mxu0 %v1283
      %2087 = vmatpush.bf16.msra.mxu0 %v1279
      %2088 = vmatpush.bf16.msra.mxu0 %v1275
      %2089 = vmatpush.bf16.msra.mxu0 %v1271
      %2090 = vmatpush.bf16.msra.mxu0 %v1267
      %2091 = vmatpush.bf16.msra.mxu0 %v1263
      %2092 = vmatmul.bf16.gmra.mxu0 %v218
      %v2093 = vpop.f32.mrf.mxu0
      %v2094 = vadd.f32 %v487, %v2093
      %v2095 = vpop.f32.mrf.mxu0
      %2096 = vdwg.mxu0
      %2097 = vmatpush.bf16.msra.mxu0 %v1323
      %2098 = vmatpush.bf16.msra.mxu0 %v1319
      %2099 = vmatpush.bf16.msra.mxu0 %v1315
      %2100 = vmatpush.bf16.msra.mxu0 %v1311
      %2101 = vmatpush.bf16.msra.mxu0 %v1307
      %2102 = vmatpush.bf16.msra.mxu0 %v1303
      %2103 = vmatpush.bf16.msra.mxu0 %v1299
      %2104 = vmatpush.bf16.msra.mxu0 %v1295
      %2105 = vmatmul.bf16.gmra.mxu0 %v219
      %v2106 = vpop.f32.mrf.mxu0
      %v2107 = vadd.f32 %v2094, %v2106
      %v2108 = vpop.f32.mrf.mxu0
      %2109 = vdwg.mxu0
      %2110 = vmatpush.bf16.msra.mxu0 %v1355
      %2111 = vmatpush.bf16.msra.mxu0 %v1351
      %2112 = vmatpush.bf16.msra.mxu0 %v1347
      %2113 = vmatpush.bf16.msra.mxu0 %v1343
      %2114 = vmatpush.bf16.msra.mxu0 %v1339
      %2115 = vmatpush.bf16.msra.mxu0 %v1335
      %2116 = vmatpush.bf16.msra.mxu0 %v1331
      %2117 = vmatpush.bf16.msra.mxu0 %v1327
      %2118 = vmatmul.bf16.gmra.mxu0 %v220
      %v2119 = vpop.f32.mrf.mxu0
      %v2120 = vadd.f32 %v2107, %v2119
      %v2121 = vpop.f32.mrf.mxu0
      %2122 = vdwg.mxu0
      %2123 = vmatpush.bf16.msra.mxu0 %v1387
      %2124 = vmatpush.bf16.msra.mxu0 %v1383
      %2125 = vmatpush.bf16.msra.mxu0 %v1379
      %2126 = vmatpush.bf16.msra.mxu0 %v1375
      %2127 = vmatpush.bf16.msra.mxu0 %v1371
      %2128 = vmatpush.bf16.msra.mxu0 %v1367
      %2129 = vmatpush.bf16.msra.mxu0 %v1363
      %2130 = vmatpush.bf16.msra.mxu0 %v1359
      %2131 = vmatmul.bf16.gmra.mxu0 %v221
      %v2132 = vpop.f32.mrf.mxu0
      %v2133 = vadd.f32 %v2120, %v2132
      %v2134 = vpop.f32.mrf.mxu0
      %2135 = vdwg.mxu0
      %2136 = vmatpush.bf16.msra.mxu0 %v1419
      %2137 = vmatpush.bf16.msra.mxu0 %v1415
      %2138 = vmatpush.bf16.msra.mxu0 %v1411
      %2139 = vmatpush.bf16.msra.mxu0 %v1407
      %2140 = vmatpush.bf16.msra.mxu0 %v1403
      %2141 = vmatpush.bf16.msra.mxu0 %v1399
      %2142 = vmatpush.bf16.msra.mxu0 %v1395
      %2143 = vmatpush.bf16.msra.mxu0 %v1391
      %2144 = vmatmul.bf16.gmra.mxu0 %v222
      %v2145 = vpop.f32.mrf.mxu0
      %v2146 = vadd.f32 %v2133, %v2145
      %v2147 = vpop.f32.mrf.mxu0
      %2148 = vdwg.mxu0
      %2149 = vmatpush.bf16.msra.mxu0 %v1451
      %2150 = vmatpush.bf16.msra.mxu0 %v1447
      %2151 = vmatpush.bf16.msra.mxu0 %v1443
      %2152 = vmatpush.bf16.msra.mxu0 %v1439
      %2153 = vmatpush.bf16.msra.mxu0 %v1435
      %2154 = vmatpush.bf16.msra.mxu0 %v1431
      %2155 = vmatpush.bf16.msra.mxu0 %v1427
      %2156 = vmatpush.bf16.msra.mxu0 %v1423
      %2157 = vmatmul.bf16.gmra.mxu0 %v223
      %v2158 = vpop.f32.mrf.mxu0
      %v2159 = vadd.f32 %v2146, %v2158
      %v2160 = vpop.f32.mrf.mxu0
      %2161 = vdwg.mxu0
      %2162 = vmatpush.bf16.msra.mxu0 %v1483
      %2163 = vmatpush.bf16.msra.mxu0 %v1479
      %2164 = vmatpush.bf16.msra.mxu0 %v1475
      %2165 = vmatpush.bf16.msra.mxu0 %v1471
      %2166 = vmatpush.bf16.msra.mxu0 %v1467
      %2167 = vmatpush.bf16.msra.mxu0 %v1463
      %2168 = vmatpush.bf16.msra.mxu0 %v1459
      %2169 = vmatpush.bf16.msra.mxu0 %v1455
      %2170 = vmatmul.bf16.gmra.mxu0 %v224
      %v2171 = vpop.f32.mrf.mxu0
      %v2172 = vadd.f32 %v2159, %v2171
      %v2173 = vpop.f32.mrf.mxu0
      %2174 = vdwg.mxu0
      %2175 = vmatpush.bf16.msra.mxu0 %v1515
      %2176 = vmatpush.bf16.msra.mxu0 %v1511
      %2177 = vmatpush.bf16.msra.mxu0 %v1507
      %2178 = vmatpush.bf16.msra.mxu0 %v1503
      %2179 = vmatpush.bf16.msra.mxu0 %v1499
      %2180 = vmatpush.bf16.msra.mxu0 %v1495
      %2181 = vmatpush.bf16.msra.mxu0 %v1491
      %2182 = vmatpush.bf16.msra.mxu0 %v1487
      %2183 = vmatmul.bf16.gmra.mxu0 %v225
      %v2184 = vpop.f32.mrf.mxu0
      %v2185 = vadd.f32 %v2172, %v2184
      %v2186 = vpop.f32.mrf.mxu0
      %2187 = vdwg.mxu0
      %v2188 = vmax.f32 %v1873, 0.0
      %v2189 = vmax.f32 %v1977, 0.0
      %v2190 = vmax.f32 %v2081, 0.0
      %v2191 = vmax.f32 %v2185, 0.0
      %v2192 = vpack.c.bf16 %v2188, %v2188
      %v2193 = vpack.c.bf16 %v2189, %v2189
      %v2194 = vpack.c.bf16 %v2190, %v2190
      %v2195 = vpack.c.bf16 %v2191, %v2191
      %v2196 = vld [vmem:[#allocation12] sm:$0xf]
      %v2197 = vld [vmem:[#allocation12 + $0x4] sm:$0xf]
      %v2198 = vld [vmem:[#allocation12 + $0x8] sm:$0xf]
      %v2199 = vld [vmem:[#allocation12 + $0xc] sm:$0xf]
      %v2200 = vld [vmem:[#allocation12 + $0x10] sm:$0xf]
      %v2201 = vld [vmem:[#allocation12 + $0x14] sm:$0xf]
      %v2202 = vld [vmem:[#allocation12 + $0x18] sm:$0xf]
      %v2203 = vld [vmem:[#allocation12 + $0x1c] sm:$0xf]
      %v2204 = vld [vmem:[#allocation12 + $0x20] sm:$0xf]
      %v2205 = vld [vmem:[#allocation12 + $0x24] sm:$0xf]
      %v2206 = vld [vmem:[#allocation12 + $0x28] sm:$0xf]
      %v2207 = vld [vmem:[#allocation12 + $0x2c] sm:$0xf]
      %v2208 = vld [vmem:[#allocation12 + $0x30] sm:$0xf]
      %v2209 = vld [vmem:[#allocation12 + $0x34] sm:$0xf]
      %v2210 = vld [vmem:[#allocation12 + $0x38] sm:$0xf]
      %v2211 = vld [vmem:[#allocation12 + $0x3c] sm:$0xf]
      %v2212 = vld [vmem:[#allocation12 + $0x40] sm:$0xf]
      %v2213 = vld [vmem:[#allocation12 + $0x44] sm:$0xf]
      %v2214 = vld [vmem:[#allocation12 + $0x48] sm:$0xf]
      %v2215 = vld [vmem:[#allocation12 + $0x4c] sm:$0xf]
      %v2216 = vld [vmem:[#allocation12 + $0x50] sm:$0xf]
      %v2217 = vld [vmem:[#allocation12 + $0x54] sm:$0xf]
      %v2218 = vld [vmem:[#allocation12 + $0x58] sm:$0xf]
      %v2219 = vld [vmem:[#allocation12 + $0x5c] sm:$0xf]
      %v2220 = vld [vmem:[#allocation12 + $0x60] sm:$0xf]
      %v2221 = vld [vmem:[#allocation12 + $0x64] sm:$0xf]
      %v2222 = vld [vmem:[#allocation12 + $0x68] sm:$0xf]
      %v2223 = vld [vmem:[#allocation12 + $0x6c] sm:$0xf]
      %v2224 = vld [vmem:[#allocation12 + $0x70] sm:$0xf]
      %v2225 = vld [vmem:[#allocation12 + $0x74] sm:$0xf]
      %v2226 = vld [vmem:[#allocation12 + $0x78] sm:$0xf]
      %v2227 = vld [vmem:[#allocation12 + $0x7c] sm:$0xf]
      %v2228 = vld [vmem:[#allocation12 + $0x80] sm:$0xf]
      %v2229 = vld [vmem:[#allocation12 + $0x84] sm:$0xf]
      %v2230 = vld [vmem:[#allocation12 + $0x88] sm:$0xf]
      %v2231 = vld [vmem:[#allocation12 + $0x8c] sm:$0xf]
      %v2232 = vld [vmem:[#allocation12 + $0x90] sm:$0xf]
      %v2233 = vld [vmem:[#allocation12 + $0x94] sm:$0xf]
      %v2234 = vld [vmem:[#allocation12 + $0x98] sm:$0xf]
      %v2235 = vld [vmem:[#allocation12 + $0x9c] sm:$0xf]
      %v2236 = vld [vmem:[#allocation12 + $0xa0] sm:$0xf]
      %v2237 = vld [vmem:[#allocation12 + $0xa4] sm:$0xf]
      %v2238 = vld [vmem:[#allocation12 + $0xa8] sm:$0xf]
      %v2239 = vld [vmem:[#allocation12 + $0xac] sm:$0xf]
      %v2240 = vld [vmem:[#allocation12 + $0xb0] sm:$0xf]
      %v2241 = vld [vmem:[#allocation12 + $0xb4] sm:$0xf]
      %v2242 = vld [vmem:[#allocation12 + $0xb8] sm:$0xf]
      %v2243 = vld [vmem:[#allocation12 + $0xbc] sm:$0xf]
      %v2244 = vld [vmem:[#allocation12 + $0xc0] sm:$0xf]
      %v2245 = vld [vmem:[#allocation12 + $0xc4] sm:$0xf]
      %v2246 = vld [vmem:[#allocation12 + $0xc8] sm:$0xf]
      %v2247 = vld [vmem:[#allocation12 + $0xcc] sm:$0xf]
      %v2248 = vld [vmem:[#allocation12 + $0xd0] sm:$0xf]
      %v2249 = vld [vmem:[#allocation12 + $0xd4] sm:$0xf]
      %v2250 = vld [vmem:[#allocation12 + $0xd8] sm:$0xf]
      %v2251 = vld [vmem:[#allocation12 + $0xdc] sm:$0xf]
      %v2252 = vld [vmem:[#allocation12 + $0xe0] sm:$0xf]
      %v2253 = vld [vmem:[#allocation12 + $0xe4] sm:$0xf]
      %v2254 = vld [vmem:[#allocation12 + $0xe8] sm:$0xf]
      %v2255 = vld [vmem:[#allocation12 + $0xec] sm:$0xf]
      %v2256 = vld [vmem:[#allocation12 + $0xf0] sm:$0xf]
      %v2257 = vld [vmem:[#allocation12 + $0xf4] sm:$0xf]
      %v2258 = vld [vmem:[#allocation12 + $0xf8] sm:$0xf]
      %v2259 = vld [vmem:[#allocation12 + $0xfc] sm:$0xf]
      %v2260 = vld [vmem:[%s6] sm:$0x1]
      %v2262 = vperm.slane %v2260, 0
      %v2328 = vunpack.c.l.b16 %v2196
      %v2329 = vunpack.c.l.b16 %v2197
      %v2330 = vunpack.c.l.b16 %v2198
      %v2331 = vunpack.c.l.b16 %v2199
      %v2332 = vunpack.c.l.b16 %v2200
      %v2333 = vunpack.c.l.b16 %v2201
      %v2334 = vunpack.c.l.b16 %v2202
      %v2335 = vunpack.c.l.b16 %v2203
      %v2336 = vunpack.c.l.b16 %v2204
      %v2337 = vunpack.c.l.b16 %v2205
      %v2338 = vunpack.c.l.b16 %v2206
      %v2339 = vunpack.c.l.b16 %v2207
      %v2340 = vunpack.c.l.b16 %v2208
      %v2341 = vunpack.c.l.b16 %v2209
      %v2342 = vunpack.c.l.b16 %v2210
      %v2343 = vunpack.c.l.b16 %v2211
      %v2344 = vunpack.c.l.b16 %v2212
      %v2345 = vunpack.c.l.b16 %v2213
      %v2346 = vunpack.c.l.b16 %v2214
      %v2347 = vunpack.c.l.b16 %v2215
      %v2348 = vunpack.c.l.b16 %v2216
      %v2349 = vunpack.c.l.b16 %v2217
      %v2350 = vunpack.c.l.b16 %v2218
      %v2351 = vunpack.c.l.b16 %v2219
      %v2352 = vunpack.c.l.b16 %v2220
      %v2353 = vunpack.c.l.b16 %v2221
      %v2354 = vunpack.c.l.b16 %v2222
      %v2355 = vunpack.c.l.b16 %v2223
      %v2356 = vunpack.c.l.b16 %v2224
      %v2357 = vunpack.c.l.b16 %v2225
      %v2358 = vunpack.c.l.b16 %v2226
      %v2359 = vunpack.c.l.b16 %v2227
      %v2360 = vunpack.c.l.b16 %v2228
      %v2361 = vunpack.c.l.b16 %v2229
      %v2362 = vunpack.c.l.b16 %v2230
      %v2363 = vunpack.c.l.b16 %v2231
      %v2364 = vunpack.c.l.b16 %v2232
      %v2365 = vunpack.c.l.b16 %v2233
      %v2366 = vunpack.c.l.b16 %v2234
      %v2367 = vunpack.c.l.b16 %v2235
      %v2368 = vunpack.c.l.b16 %v2236
      %v2369 = vunpack.c.l.b16 %v2237
      %v2370 = vunpack.c.l.b16 %v2238
      %v2371 = vunpack.c.l.b16 %v2239
      %v2372 = vunpack.c.l.b16 %v2240
      %v2373 = vunpack.c.l.b16 %v2241
      %v2374 = vunpack.c.l.b16 %v2242
      %v2375 = vunpack.c.l.b16 %v2243
      %v2376 = vunpack.c.l.b16 %v2244
      %v2377 = vunpack.c.l.b16 %v2245
      %v2378 = vunpack.c.l.b16 %v2246
      %v2379 = vunpack.c.l.b16 %v2247
      %v2380 = vunpack.c.l.b16 %v2248
      %v2381 = vunpack.c.l.b16 %v2249
      %v2382 = vunpack.c.l.b16 %v2250
      %v2383 = vunpack.c.l.b16 %v2251
      %v2384 = vunpack.c.l.b16 %v2252
      %v2385 = vunpack.c.l.b16 %v2253
      %v2386 = vunpack.c.l.b16 %v2254
      %v2387 = vunpack.c.l.b16 %v2255
      %v2388 = vunpack.c.l.b16 %v2256
      %v2389 = vunpack.c.l.b16 %v2257
      %v2390 = vunpack.c.l.b16 %v2258
      %v2391 = vunpack.c.l.b16 %v2259
      %v2392 = vpack.c.b16 %v2329, %v2328
      %v2393 = vpack.c.b16 %v2331, %v2330
      %v2394 = vpack.c.b16 %v2333, %v2332
      %v2395 = vpack.c.b16 %v2335, %v2334
      %v2396 = vpack.c.b16 %v2337, %v2336
      %v2397 = vpack.c.b16 %v2339, %v2338
      %v2398 = vpack.c.b16 %v2341, %v2340
      %v2399 = vpack.c.b16 %v2343, %v2342
      %v2400 = vpack.c.b16 %v2345, %v2344
      %v2401 = vpack.c.b16 %v2347, %v2346
      %v2402 = vpack.c.b16 %v2349, %v2348
      %v2403 = vpack.c.b16 %v2351, %v2350
      %v2404 = vpack.c.b16 %v2353, %v2352
      %v2405 = vpack.c.b16 %v2355, %v2354
      %v2406 = vpack.c.b16 %v2357, %v2356
      %v2407 = vpack.c.b16 %v2359, %v2358
      %v2408 = vpack.c.b16 %v2361, %v2360
      %v2409 = vpack.c.b16 %v2363, %v2362
      %v2410 = vpack.c.b16 %v2365, %v2364
      %v2411 = vpack.c.b16 %v2367, %v2366
      %v2412 = vpack.c.b16 %v2369, %v2368
      %v2413 = vpack.c.b16 %v2371, %v2370
      %v2414 = vpack.c.b16 %v2373, %v2372
      %v2415 = vpack.c.b16 %v2375, %v2374
      %v2416 = vpack.c.b16 %v2377, %v2376
      %v2417 = vpack.c.b16 %v2379, %v2378
      %v2418 = vpack.c.b16 %v2381, %v2380
      %v2419 = vpack.c.b16 %v2383, %v2382
      %v2420 = vpack.c.b16 %v2385, %v2384
      %v2421 = vpack.c.b16 %v2387, %v2386
      %v2422 = vpack.c.b16 %v2389, %v2388
      %v2423 = vpack.c.b16 %v2391, %v2390
      %2456 = vmatpush.bf16.msra.mxu0 %v2399
      %2457 = vmatpush.bf16.msra.mxu0 %v2398
      %2458 = vmatpush.bf16.msra.mxu0 %v2397
      %2459 = vmatpush.bf16.msra.mxu0 %v2396
      %2460 = vmatpush.bf16.msra.mxu0 %v2395
      %2461 = vmatpush.bf16.msra.mxu0 %v2394
      %2462 = vmatpush.bf16.msra.mxu0 %v2393
      %2463 = vmatpush.bf16.msra.mxu0 %v2392
      %2464 = vmatmul.bf16.gmra.mxu0 %v2192
      %v2465 = vpop.f32.mrf.mxu0
      %v2466 = vadd.f32 %v2262, %v2465
      %v2467 = vpop.f32.mrf.mxu0
      %2468 = vdwg.mxu0
      %2469 = vmatpush.bf16.msra.mxu0 %v2407
      %2470 = vmatpush.bf16.msra.mxu0 %v2406
      %2471 = vmatpush.bf16.msra.mxu0 %v2405
      %2472 = vmatpush.bf16.msra.mxu0 %v2404
      %2473 = vmatpush.bf16.msra.mxu0 %v2403
      %2474 = vmatpush.bf16.msra.mxu0 %v2402
      %2475 = vmatpush.bf16.msra.mxu0 %v2401
      %2476 = vmatpush.bf16.msra.mxu0 %v2400
      %2477 = vmatmul.bf16.gmra.mxu0 %v2193
      %v2478 = vpop.f32.mrf.mxu0
      %v2479 = vadd.f32 %v2466, %v2478
      %v2480 = vpop.f32.mrf.mxu0
      %2481 = vdwg.mxu0
      %2482 = vmatpush.bf16.msra.mxu0 %v2415
      %2483 = vmatpush.bf16.msra.mxu0 %v2414
      %2484 = vmatpush.bf16.msra.mxu0 %v2413
      %2485 = vmatpush.bf16.msra.mxu0 %v2412
      %2486 = vmatpush.bf16.msra.mxu0 %v2411
      %2487 = vmatpush.bf16.msra.mxu0 %v2410
      %2488 = vmatpush.bf16.msra.mxu0 %v2409
      %2489 = vmatpush.bf16.msra.mxu0 %v2408
      %2490 = vmatmul.bf16.gmra.mxu0 %v2194
      %v2491 = vpop.f32.mrf.mxu0
      %v2492 = vadd.f32 %v2479, %v2491
      %v2493 = vpop.f32.mrf.mxu0
      %2494 = vdwg.mxu0
      %2495 = vmatpush.bf16.msra.mxu0 %v2423
      %2496 = vmatpush.bf16.msra.mxu0 %v2422
      %2497 = vmatpush.bf16.msra.mxu0 %v2421
      %2498 = vmatpush.bf16.msra.mxu0 %v2420
      %2499 = vmatpush.bf16.msra.mxu0 %v2419
      %2500 = vmatpush.bf16.msra.mxu0 %v2418
      %2501 = vmatpush.bf16.msra.mxu0 %v2417
      %2502 = vmatpush.bf16.msra.mxu0 %v2416
      %2503 = vmatmul.bf16.gmra.mxu0 %v2195
      %v2504 = vpop.f32.mrf.mxu0
      %v2505 = vadd.f32 %v2492, %v2504
      %v2506 = vpop.f32.mrf.mxu0
      %2507 = vdwg.mxu0
      %v2508 = vmax.f32 %v2505, 0.0
      %v2509 = vpack.c.bf16 %v2508, %v2508
      %v2510 = vld [vmem:[#allocation14] sm:$0xf]
      %v2511 = vld [vmem:[#allocation14 + $0x4] sm:$0xf]
      %v2512 = vld [vmem:[#allocation14 + $0x8] sm:$0xf]
      %v2513 = vld [vmem:[#allocation14 + $0xc] sm:$0xf]
      %v2514 = vld [vmem:[#allocation14 + $0x10] sm:$0xf]
      %v2515 = vld [vmem:[#allocation14 + $0x14] sm:$0xf]
      %v2516 = vld [vmem:[#allocation14 + $0x18] sm:$0xf]
      %v2517 = vld [vmem:[#allocation14 + $0x1c] sm:$0xf]
      %v2518 = vld [vmem:[#allocation14 + $0x20] sm:$0xf]
      %v2519 = vld [vmem:[#allocation14 + $0x24] sm:$0xf]
      %v2520 = vld [vmem:[#allocation14 + $0x28] sm:$0xf]
      %v2521 = vld [vmem:[#allocation14 + $0x2c] sm:$0xf]
      %v2522 = vld [vmem:[#allocation14 + $0x30] sm:$0xf]
      %v2523 = vld [vmem:[#allocation14 + $0x34] sm:$0xf]
      %v2524 = vld [vmem:[#allocation14 + $0x38] sm:$0xf]
      %v2525 = vld [vmem:[#allocation14 + $0x3c] sm:$0xf]
      %v2526 = vld [vmem:[%s8] sm:$0x1]
      %v2528 = vperm.slane %v2526, 0
      %v2546 = vunpack.c.l.b16 %v2510
      %v2547 = vunpack.c.l.b16 %v2511
      %v2548 = vunpack.c.l.b16 %v2512
      %v2549 = vunpack.c.l.b16 %v2513
      %v2550 = vunpack.c.l.b16 %v2514
      %v2551 = vunpack.c.l.b16 %v2515
      %v2552 = vunpack.c.l.b16 %v2516
      %v2553 = vunpack.c.l.b16 %v2517
      %v2554 = vunpack.c.l.b16 %v2518
      %v2555 = vunpack.c.l.b16 %v2519
      %v2556 = vunpack.c.l.b16 %v2520
      %v2557 = vunpack.c.l.b16 %v2521
      %v2558 = vunpack.c.l.b16 %v2522
      %v2559 = vunpack.c.l.b16 %v2523
      %v2560 = vunpack.c.l.b16 %v2524
      %v2561 = vunpack.c.l.b16 %v2525
      %v2562 = vpack.c.b16 %v2547, %v2546
      %v2563 = vpack.c.b16 %v2549, %v2548
      %v2564 = vpack.c.b16 %v2551, %v2550
      %v2565 = vpack.c.b16 %v2553, %v2552
      %v2566 = vpack.c.b16 %v2555, %v2554
      %v2567 = vpack.c.b16 %v2557, %v2556
      %v2568 = vpack.c.b16 %v2559, %v2558
      %v2569 = vpack.c.b16 %v2561, %v2560
      %2578 = vmatpush.bf16.msra.mxu0 %v2569
      %2579 = vmatpush.bf16.msra.mxu0 %v2568
      %2580 = vmatpush.bf16.msra.mxu0 %v2567
      %2581 = vmatpush.bf16.msra.mxu0 %v2566
      %2582 = vmatpush.bf16.msra.mxu0 %v2565
      %2583 = vmatpush.bf16.msra.mxu0 %v2564
      %2584 = vmatpush.bf16.msra.mxu0 %v2563
      %2585 = vmatpush.bf16.msra.mxu0 %v2562
      %2586 = vmatmul.bf16.gmra.mxu0 %v2509
      %v2587 = vpop.f32.mrf.mxu0
      %v2588 = vadd.f32 %v2528, %v2587
      %v2589 = vpop.f32.mrf.mxu0
      %2590 = vdwg.mxu0
      %2591 = vst [vmem:[#allocation15] sm:$0xff] %v2588
    $region73: #{tpu_custom_call.1} parent=1 // pred_fallthru
      _
    // Predicated region
    $region74: #{tpu_custom_call.1} parent=1 // pred_check
      _
    $region75: #{tpu_custom_call.1} parent=1 // pred_check_branch
      %2593 = sbr.rel (0) target = $region77
    $region76: #{tpu_custom_call.1} parent=1 // pred_region
      %2595 = vsyncadd [#allocation5], 0
      %s2597 = sshll.u32 [#allocation15], 4
      %s2598 = int_to_ptr.vmem [resolvable:$true] %s2597
      %s2599 = sshll.u32 %s9, 4
      %s2600 = int_to_ptr.hbm [resolvable:$true] %s2599
      %2602 = dma.vmem_to_hbm [thread:$0]  %s2598, 128, %s2600, [#allocation5]
    $region77: #{tpu_custom_call.1} parent=1 // pred_fallthru
      _
    // Predicated region
    $region78: #{tpu_custom_call.1} parent=1 // pred_check
      _
    $region79: #{tpu_custom_call.1} parent=1 // pred_check_branch
      %2604 = sbr.rel (0) target = $region81
    $region80: #{tpu_custom_call.1} parent=1 // pred_region
      %2606 = dma.done [#allocation5], 128
    $region81: #{tpu_custom_call.1} parent=1 // pred_fallthru
      _
    %2607 = vsyncpa [#allocation4], 1
    %2608 = vsyncpa [#allocation7], 1
    %2609 = vsyncpa [#allocation10], 1
    %2610 = vsyncpa [#allocation13], 1
    %2611 = vsyncpa [#allocation5], 1

</llo_original>
